<compile_context>
chip_gen: v7x
topology: tpu7x:2x2x1
jax: 0.10.0
libtpu: 0.0.40
codegen_flags: <defaults>
</compile_context>

<pallas_src>
import functools

import jax
import jax.numpy as jnp
from jax import lax
from jax.experimental import pallas as pl
from jax.experimental.pallas import tpu as pltpu


def _vmem_limit_bytes(fraction=0.8):
  """Generation-aware VMEM limit: ~0.8x physical capacity.

  ~100 MiB on v5e/v6e (128 MiB physical), ~51 MiB on v7x (64 MiB physical);
  falls back to a v7x-safe value if the query is unavailable.
  """
  try:
    cap = int(getattr(pltpu.get_tpu_info(), "vmem_capacity_bytes", 0))
  except Exception:
    cap = 0
  if cap <= 0:
    cap = 64 * 1024 * 1024
  return int(cap * fraction)


def _efficient_attention_kernel(
    x_ref, wq_ref, wkv_ref, wout_ref, bout_ref, gamma_ref, beta_ref,   # inputs
    proj_ref, gn_scale_ref, gn_shift_ref,                              # outputs
    m_ref, l_ref, ctx_ref, weff_ref, gn_sum_ref, gn_sq_ref,            # scratch
    *, heads, dim_head, q_scale, eps, count,
):
  """grid = (batch, pass, n_tiles); pass 0 = k/v context, pass 1 = q/project."""
  hidden = heads * dim_head
  c = wout_ref.shape[0]
  tn = x_ref.shape[2]                    # spatial tile width (lane axis)
  p_idx = pl.program_id(1)
  t_idx = pl.program_id(2)
  last_t = pl.num_programs(2) - 1

  # ------------------------------------------------------------- pass 0 ----
  @pl.when(jnp.logical_and(p_idx == 0, t_idx == 0))
  def _init_kv_state():
    m_ref[...] = jnp.full_like(m_ref, -jnp.inf)
    l_ref[...] = jnp.zeros_like(l_ref)
    ctx_ref[...] = jnp.zeros_like(ctx_ref)

  @pl.when(p_idx == 0)
  def _accumulate_context():
    x = x_ref[0].astype(jnp.bfloat16)                     # per-tile cast
    kv = jnp.dot(wkv_ref[...], x,
                 preferred_element_type=jnp.float32)      # (2*hidden, tn)
    k3 = kv[:hidden].reshape(heads, dim_head, tn)         # (h, d, tn)
    v3 = kv[hidden:].reshape(heads, dim_head, tn)         # (h, d, tn)

    # Online softmax over the spatial axis N for k (flash-style rescaling).
    m_prev = m_ref[...]                                   # (h, d, 1)
    m_new = jnp.maximum(m_prev, jnp.max(k3, axis=2, keepdims=True))
    alpha = jnp.exp(m_prev - m_new)
    p = jnp.exp(k3 - m_new)                               # (h, d, tn) f32
    # Note: the row-sum could ride the MXU by appending a ones row to v3, but
    # the unaligned lane slices of the fused result cost more than one reduce.
    l_ref[...] = alpha * l_ref[...] + jnp.sum(p, axis=2, keepdims=True)
    # ctx[h, d, e] += sum_n p[h, d, n] * v[h, e, n]
    ctx_upd = lax.dot_general(
        p.astype(jnp.bfloat16), v3.astype(jnp.bfloat16),
        dimension_numbers=(((2,), (2,)), ((0,), (0,))),
        preferred_element_type=jnp.float32)               # (h, d, e)
    ctx_ref[...] = alpha * ctx_ref[...] + ctx_upd
    m_ref[...] = m_new

  # ----------------------------------- pass 1, tile 0: fold ctx into wout ---
  @pl.when(jnp.logical_and(p_idx == 1, t_idx == 0))
  def _prepare_output_pass():
    # Exact reciprocal: runs once per sample and scales the whole context.
    inv_l = pl.reciprocal(l_ref[...])                     # (h, d, 1)
    ctx_n = (ctx_ref[...] * inv_l).astype(jnp.bfloat16)   # (h, d, e)
    # W_eff[c, h*dh + d] = sum_e wout[c, h*dh + e] * ctx_n[h, d, e], so each
    # pass-1 tile needs only ONE (c, hidden) @ (hidden, tn) MXU matmul.
    # Static per-head loop: tiny, once per sample, avoids 3-D transposes.
    parts = []
    for hh in range(heads):
      wout_h = wout_ref[:, hh * dim_head:(hh + 1) * dim_head]   # (c, e)
      weff_h = lax.dot_general(
          wout_h, ctx_n[hh],
          dimension_numbers=(((1,), (1,)), ((), ())),
          preferred_element_type=jnp.float32)             # (c, d)
      parts.append(weff_h)
    weff_ref[...] = jnp.concatenate(parts, axis=1).astype(weff_ref.dtype)
    gn_sum_ref[...] = jnp.zeros_like(gn_sum_ref)
    gn_sq_ref[...] = jnp.zeros_like(gn_sq_ref)

  # ------------------------------------------------------------- pass 1 ----
  @pl.when(p_idx == 1)
  def _project_tile():
    x = x_ref[0].astype(jnp.bfloat16)                     # (c, tn)
    q = jnp.dot(wq_ref[...], x,
                preferred_element_type=jnp.float32)       # (hidden, tn)
    q3 = q.reshape(heads, dim_head, tn)
    # softmax over the head-channel axis; fold `* scale` into the normalizer.
    q3 = jnp.exp(q3 - jnp.max(q3, axis=1, keepdims=True))
    denom = jnp.sum(q3, axis=1, keepdims=True)            # (h, 1, tn)
    q3 = q3 * (q_scale * pl.reciprocal(denom, approx=True))
    q_flat = q3.reshape(hidden, tn).astype(jnp.bfloat16)

    proj = jnp.dot(weff_ref[...], q_flat,
                   preferred_element_type=jnp.float32)    # (c, tn)
    proj = proj + bout_ref[...]
    proj_ref[0] = proj                                    # tiled output block

    # GroupNorm statistics as elementwise partial sums (no per-tile XLU
    # cross-lane reductions); reduced once at the last tile.
    gn_sum_ref[...] += proj
    gn_sq_ref[...] += proj * proj

  @pl.when(jnp.logical_and(p_idx == 1, t_idx == last_t))
  def _emit_groupnorm_coeffs():
    total = jnp.sum(gn_sum_ref[...])
    total_sq = jnp.sum(gn_sq_ref[...])
    inv_count = 1.0 / count
    mean = total * inv_count
    # TODO(synk): E[x^2]-mean^2 in f32 can cancel for huge c*n with a large
    # mean; switch to a Welford-style merge if tolerances tighten.
    var = jnp.maximum(total_sq * inv_count - mean * mean, 0.0)
    inv = lax.rsqrt(var + eps)
    g = gamma_ref[...]                                    # (c, 1)
    gn_scale_ref[0] = inv * g
    gn_shift_ref[0] = beta_ref[...] - (mean * inv) * g


def _groupnorm_apply_kernel(proj_ref, scale_ref, shift_ref, o_ref):
  """Trivially parallel GroupNorm affine: out = proj * scale + shift."""
  o_ref[0] = proj_ref[0] * scale_ref[0] + shift_ref[0]


def efficient_attention(x_nchw, params, *, heads, dim_head, eps=1e-5,
                        block_n=1024):
  """x_nchw: (B, C, H, W) float32.  Returns (B, C, H, W) float32."""
  b, c, h, w = x_nchw.shape
  n = h * w
  hidden = heads * dim_head
  q_scale = float(dim_head) ** (-0.5)

  # Keep the [:hidden]/[hidden:] slices and (hidden,tn)->(heads,dim_head,tn)
  # reshapes layout-preserving (f32 sublane tile = 8).
  assert dim_head % 8 == 0, "dim_head must be a multiple of 8"

  block_n = min(block_n, n)
  # TODO(synk): pad/mask N when H*W is not a multiple of the lane tile
  # (requires masking the k-softmax and GroupNorm statistics).
  assert n % block_n == 0, "H*W must be divisible by block_n"
  n_tiles = n // block_n

  # x stays f32 (no standalone host-side cast pass); weights go bf16 for MXU.
  x = x_nchw.reshape(b, c, n)
  wqkv = params["wqkv"].astype(jnp.bfloat16)              # (3*hidden, C)
  wq = wqkv[:hidden]                                      # (hidden, C)
  wkv = wqkv[hidden:]                                     # (2*hidden, C)
  wout = params["wout"].astype(jnp.bfloat16)              # (C, hidden)
  bout = params["bout"].reshape(c, 1).astype(jnp.float32)
  gamma = params["gn_weight"].reshape(c, 1).astype(jnp.float32)
  beta = params["gn_bias"].reshape(c, 1).astype(jnp.float32)

  vmem_limit = _vmem_limit_bytes()

  kernel = functools.partial(
      _efficient_attention_kernel, heads=heads, dim_head=dim_head,
      q_scale=q_scale, eps=eps, count=float(c * n))

  flops = int(b * (8 * hidden * c * n + 2 * hidden * dim_head * n
                   + 2 * c * hidden * dim_head))
  transcendentals = int(2 * b * hidden * n)
  bytes_accessed = int(2 * b * c * n * 4      # x read in both passes (f32)
                       + b * c * n * 4        # un-normalized projection (f32)
                       + 4 * hidden * c * 2   # qkv + out weights (bf16)
                       + 5 * c * 4)           # bias + GN affine + scale/shift
  cost = pl.CostEstimate(flops=flops, transcendentals=transcendentals,
                         bytes_accessed=bytes_accessed)

  # Kernel 1: attention + projection.  Output is tiled (never a resident
  # (C, N) f32 block).  Batch axis "parallel" (megacore); pass/tile axes
  # carry the per-sample accumulators ("arbitrary").
  proj, gn_scale, gn_shift = pl.pallas_call(
      kernel,
      out_shape=(
          jax.ShapeDtypeStruct((b, c, n), jnp.float32),
          jax.ShapeDtypeStruct((b, c, 1), jnp.float32),
          jax.ShapeDtypeStruct((b, c, 1), jnp.float32),
      ),
      grid_spec=pltpu.PrefetchScalarGridSpec(
          num_scalar_prefetch=0,
          grid=(b, 2, n_tiles),
          in_specs=[
              pl.BlockSpec((1, c, block_n), lambda i, p, t: (i, 0, t)),
              # Constant-index weight/affine inputs; single-buffer residency
              # (pl.Buffered(1)) would shave a few MiB on v7x but is left at
              # the default for lowering safety.
              pl.BlockSpec((hidden, c), lambda i, p, t: (0, 0)),
              pl.BlockSpec((2 * hidden, c), lambda i, p, t: (0, 0)),
              pl.BlockSpec((c, hidden), lambda i, p, t: (0, 0)),
              pl.BlockSpec((c, 1), lambda i, p, t: (0, 0)),
              pl.BlockSpec((c, 1), lambda i, p, t: (0, 0)),
              pl.BlockSpec((c, 1), lambda i, p, t: (0, 0)),
          ],
          out_specs=[
              # p*t pins the block index at 0 during pass 0 (nothing written
              # there), then walks the tiles during pass 1.
              pl.BlockSpec((1, c, block_n), lambda i, p, t: (i, 0, p * t)),
              pl.BlockSpec((1, c, 1), lambda i, p, t: (i, 0, 0)),
              pl.BlockSpec((1, c, 1), lambda i, p, t: (i, 0, 0)),
          ],
          scratch_shapes=[
              pltpu.VMEM((heads, dim_head, 1), jnp.float32),         # running max
              pltpu.VMEM((heads, dim_head, 1), jnp.float32),         # running sum
              pltpu.VMEM((heads, dim_head, dim_head), jnp.float32),  # ctx acc
              pltpu.VMEM((c, hidden), jnp.bfloat16),                 # W_eff
              pltpu.VMEM((c, block_n), jnp.float32),                 # GN sum
              pltpu.VMEM((c, block_n), jnp.float32),                 # GN sumsq
          ]),
      compiler_params=pltpu.CompilerParams(
          dimension_semantics=("parallel", "arbitrary", "arbitrary"),
          vmem_limit_bytes=vmem_limit),
      cost_estimate=cost,
  )(x, wq, wkv, wout, bout, gamma, beta)

  # Kernel 2: GroupNorm apply (memory-bound, fully parallel follow-up).
  out = pl.pallas_call(
      _groupnorm_apply_kernel,
      out_shape=jax.ShapeDtypeStruct((b, c, n), jnp.float32),
      grid_spec=pltpu.PrefetchScalarGridSpec(
          num_scalar_prefetch=0,
          grid=(b, n_tiles),
          in_specs=[
              pl.BlockSpec((1, c, block_n), lambda i, t: (i, 0, t)),
              pl.BlockSpec((1, c, 1), lambda i, t: (i, 0, 0)),
              pl.BlockSpec((1, c, 1), lambda i, t: (i, 0, 0)),
          ],
          out_specs=pl.BlockSpec((1, c, block_n), lambda i, t: (i, 0, t))),
      compiler_params=pltpu.CompilerParams(
          dimension_semantics=("parallel", "parallel"),
          vmem_limit_bytes=vmem_limit),
  )(proj, gn_scale, gn_shift)

  return out.reshape(b, c, h, w)


def efficient_attention_ref(x_nchw, params, *, heads, dim_head, eps=1e-5):
  """Pure-JAX f32 reference mirroring the PyTorch module."""
  b, c, h, w = x_nchw.shape
  n = h * w
  hidden = heads * dim_head
  scale = float(dim_head) ** (-0.5)

  x = x_nchw.reshape(b, c, n)
  qkv = jnp.einsum("oc,bcn->bon", params["wqkv"], x)
  q, k, v = jnp.split(qkv, 3, axis=1)

  def split_heads(t):
    return t.reshape(b, heads, dim_head, n)

  q, k, v = map(split_heads, (q, k, v))
  q = jax.nn.softmax(q, axis=-2) * scale
  k = jax.nn.softmax(k, axis=-1)
  context = jnp.einsum("bhdn,bhen->bhde", k, v)
  out = jnp.einsum("bhde,bhdn->bhen", context, q)
  out = out.reshape(b, hidden, n)
  proj = jnp.einsum("oc,bcn->bon", params["wout"], out)
  proj = proj + params["bout"][None, :, None]
  mean = jnp.mean(proj, axis=(1, 2), keepdims=True)
  var = jnp.mean((proj - mean) ** 2, axis=(1, 2), keepdims=True)
  y = (proj - mean) * lax.rsqrt(var + eps)
  y = y * params["gn_weight"][None, :, None] + params["gn_bias"][None, :, None]
  return y.reshape(b, c, h, w)


if __name__ == "__main__":
  # Small, deterministic configuration (N = 16*16 = 256 -> 2 spatial tiles).
  B, DIM, H, W = 2, 8, 16, 16
  HEADS, DIM_HEAD = 2, 8
  HIDDEN = HEADS * DIM_HEAD

  key = jax.random.PRNGKey(0)
  kx, kq, ko, kb, kg, kbt = jax.random.split(key, 6)

  x = jax.random.normal(kx, (B, DIM, H, W), dtype=jnp.float32)
  params = {
      # to_qkv: Conv2d(dim, 3*hidden, 1, bias=False) -> weight (3*hidden, dim)
      "wqkv": jax.random.normal(kq, (3 * HIDDEN, DIM), dtype=jnp.float32) * 0.1,
      # to_out[0]: Conv2d(hidden, dim, 1) -> weight (dim, hidden), bias (dim,)
      "wout": jax.random.normal(ko, (DIM, HIDDEN), dtype=jnp.float32) * 0.1,
      "bout": jax.random.normal(kb, (DIM,), dtype=jnp.float32) * 0.1,
      # to_out[1]: GroupNorm(1, dim) affine params
      "gn_weight": 1.0 + 0.1 * jax.random.normal(kg, (DIM,), dtype=jnp.float32),
      "gn_bias": 0.1 * jax.random.normal(kbt, (DIM,), dtype=jnp.float32),
  }

  out = efficient_attention(x, params, heads=HEADS, dim_head=DIM_HEAD,
                            block_n=128)
  out = jax.block_until_ready(out)

  ref = efficient_attention_ref(x, params, heads=HEADS, dim_head=DIM_HEAD)
  ref = jax.block_until_ready(ref)

  assert out.shape == (B, DIM, H, W)
  assert bool(jnp.all(jnp.isfinite(out)))
  # Kernel matmuls run in bf16 (f32 accumulate) vs. an all-f32 reference, so
  # use a bf16-appropriate tolerance.
  max_err = float(jnp.max(jnp.abs(out - ref)))
  assert bool(jnp.allclose(out, ref, atol=1e-2, rtol=1e-2)), max_err

  print("KERNEL_OK")
</pallas_src>

<mosaic_0001>
module attributes {stable_mosaic.version = 11 : i64} {
  func.func @_efficient_attention_kernel(%arg0: i32, %arg1: i32, %arg2: i32, %arg3: memref<1x8x128xf32, #tpu.memory_space<vmem>>, %arg4: memref<16x8xbf16, #tpu.memory_space<vmem>>, %arg5: memref<32x8xbf16, #tpu.memory_space<vmem>>, %arg6: memref<8x16xbf16, #tpu.memory_space<vmem>>, %arg7: memref<8x1xf32, #tpu.memory_space<vmem>>, %arg8: memref<8x1xf32, #tpu.memory_space<vmem>>, %arg9: memref<8x1xf32, #tpu.memory_space<vmem>>, %arg10: memref<1x8x128xf32, #tpu.memory_space<vmem>>, %arg11: memref<1x8x1xf32, #tpu.memory_space<vmem>>, %arg12: memref<1x8x1xf32, #tpu.memory_space<vmem>>, %arg13: memref<2x8x1xf32, #tpu.memory_space<vmem>>, %arg14: memref<2x8x1xf32, #tpu.memory_space<vmem>>, %arg15: memref<2x8x8xf32, #tpu.memory_space<vmem>>, %arg16: memref<8x16xbf16, #tpu.memory_space<vmem>>, %arg17: memref<8x128xf32, #tpu.memory_space<vmem>>, %arg18: memref<8x128xf32, #tpu.memory_space<vmem>>) attributes {dimension_semantics = [#tpu.dimension_semantics<parallel>, #tpu.dimension_semantics<arbitrary>, #tpu.dimension_semantics<arbitrary>], iteration_bounds = array<i64: 2, 2, 2>, scalar_prefetch = 0 : i64, scratch_operands = 6 : i64, tpu.core_type = #tpu.core_type<tc>, window_params = [{transform_indices = @transform_0, window_bounds = array<i64: 1, 8, 128>}, {pipeline_mode = #tpu.pipeline_mode<synchronous>, transform_indices = @transform_1, window_bounds = array<i64: 16, 8>}, {pipeline_mode = #tpu.pipeline_mode<synchronous>, transform_indices = @transform_2, window_bounds = array<i64: 32, 8>}, {pipeline_mode = #tpu.pipeline_mode<synchronous>, transform_indices = @transform_3, window_bounds = array<i64: 8, 16>}, {pipeline_mode = #tpu.pipeline_mode<synchronous>, transform_indices = @transform_4, window_bounds = array<i64: 8, 1>}, {pipeline_mode = #tpu.pipeline_mode<synchronous>, transform_indices = @transform_5, window_bounds = array<i64: 8, 1>}, {pipeline_mode = #tpu.pipeline_mode<synchronous>, transform_indices = @transform_6, window_bounds = array<i64: 8, 1>}, {transform_indices = @transform_7, window_bounds = array<i64: 1, 8, 128>}, {transform_indices = @transform_8, window_bounds = array<i64: 1, 8, 1>}, {transform_indices = @transform_9, window_bounds = array<i64: 1, 8, 1>}]} {
    %c0_i32 = arith.constant 0 : i32
    %0 = arith.cmpi eq, %arg1, %c0_i32 : i32
    %c0_i32_0 = arith.constant 0 : i32
    %1 = arith.cmpi eq, %arg2, %c0_i32_0 : i32
    %2 = arith.andi %0, %1 : i1
    %3 = arith.extui %2 : i1 to i32
    %c0_i32_1 = arith.constant 0 : i32
    %4 = arith.cmpi ne, %3, %c0_i32_1 : i32
    scf.if %4 {
      %cst = arith.constant 0xFF800000 : f32
      %21 = vector.broadcast %cst : f32 to vector<2x8x1xf32>
      %c0 = arith.constant 0 : index
      %c0_11 = arith.constant 0 : index
      %c0_12 = arith.constant 0 : index
      %22 = vector.load %arg13[%c0, %c0_11, %c0_12] : memref<2x8x1xf32, #tpu.memory_space<vmem>>, vector<2x8x1xf32>
      tpu.vector_store %arg13[%c0, %c0_11, %c0_12], %21 {strides = array<i32>} : memref<2x8x1xf32, #tpu.memory_space<vmem>>, vector<2x8x1xf32>,
      %cst_13 = arith.constant 0.000000e+00 : f32
      %23 = vector.broadcast %cst_13 : f32 to vector<2x8x1xf32>
      %c0_14 = arith.constant 0 : index
      %c0_15 = arith.constant 0 : index
      %c0_16 = arith.constant 0 : index
      %24 = vector.load %arg14[%c0_14, %c0_15, %c0_16] : memref<2x8x1xf32, #tpu.memory_space<vmem>>, vector<2x8x1xf32>
      tpu.vector_store %arg14[%c0_14, %c0_15, %c0_16], %23 {strides = array<i32>} : memref<2x8x1xf32, #tpu.memory_space<vmem>>, vector<2x8x1xf32>,
      %cst_17 = arith.constant 0.000000e+00 : f32
      %25 = vector.broadcast %cst_17 : f32 to vector<2x8x8xf32>
      %c0_18 = arith.constant 0 : index
      %c0_19 = arith.constant 0 : index
      %c0_20 = arith.constant 0 : index
      %26 = vector.load %arg15[%c0_18, %c0_19, %c0_20] : memref<2x8x8xf32, #tpu.memory_space<vmem>>, vector<2x8x8xf32>
      tpu.vector_store %arg15[%c0_18, %c0_19, %c0_20], %25 {strides = array<i32>} : memref<2x8x8xf32, #tpu.memory_space<vmem>>, vector<2x8x8xf32>,
    } else {
    }
    %c0_i32_2 = arith.constant 0 : i32
    %5 = arith.cmpi eq, %arg1, %c0_i32_2 : i32
    %6 = arith.extui %5 : i1 to i32
    %c0_i32_3 = arith.constant 0 : i32
    %7 = arith.cmpi ne, %6, %c0_i32_3 : i32
    scf.if %7 {
      %c0 = arith.constant 0 : index
      %c0_11 = arith.constant 0 : index
      %c0_12 = arith.constant 0 : index
      %21 = vector.load %arg3[%c0, %c0_11, %c0_12] : memref<1x8x128xf32, #tpu.memory_space<vmem>>, vector<1x8x128xf32>
      %22 = vector.shape_cast %21 : vector<1x8x128xf32> to vector<8x128xf32>
      %23 = arith.truncf %22 : vector<8x128xf32> to vector<8x128xbf16>
      %c0_13 = arith.constant 0 : index
      %c0_14 = arith.constant 0 : index
      %24 = vector.load %arg5[%c0_13, %c0_14] : memref<32x8xbf16, #tpu.memory_space<vmem>>, vector<32x8xbf16>
      %cst = arith.constant dense<0.000000e+00> : vector<32x128xf32>
      %25 = tpu.matmul %24, %23, %cst {dimension_numbers = #tpu.dot_dimension_numbers<[1], [0], [0], [1], [0, 0, 1, 1], [], []>} : vector<32x8xbf16>, vector<8x128xbf16>, vector<32x128xf32> -> vector<32x128xf32>
      %26 = vector.extract_strided_slice %25 {offsets = [0, 0], sizes = [16, 128], strides = [1, 1]} : vector<32x128xf32> to vector<16x128xf32>
      %27 = vector.shape_cast %26 : vector<16x128xf32> to vector<2x8x128xf32>
      %28 = vector.extract_strided_slice %25 {offsets = [16, 0], sizes = [16, 128], strides = [1, 1]} : vector<32x128xf32> to vector<16x128xf32>
      %29 = vector.shape_cast %28 : vector<16x128xf32> to vector<2x8x128xf32>
      %c0_15 = arith.constant 0 : index
      %c0_16 = arith.constant 0 : index
      %c0_17 = arith.constant 0 : index
      %30 = vector.load %arg13[%c0_15, %c0_16, %c0_17] : memref<2x8x1xf32, #tpu.memory_space<vmem>>, vector<2x8x1xf32>
      %cst_18 = arith.constant dense<0xFF800000> : vector<2x8xf32>
      %31 = vector.multi_reduction <maximumf>, %27, %cst_18 [2] : vector<2x8x128xf32> to vector<2x8xf32>
      %32 = vector.shape_cast %31 : vector<2x8xf32> to vector<2x8x1xf32>
      %33 = arith.maximumf %30, %32 : vector<2x8x1xf32>
      %34 = arith.subf %30, %33 : vector<2x8x1xf32>
      %35 = math.exp %34 : vector<2x8x1xf32>
      %36 = vector.broadcast %33 : vector<2x8x1xf32> to vector<2x8x128xf32>
      %37 = arith.subf %27, %36 : vector<2x8x128xf32>
      %38 = math.exp %37 : vector<2x8x128xf32>
      %c0_19 = arith.constant 0 : index
      %c0_20 = arith.constant 0 : index
      %c0_21 = arith.constant 0 : index
      %39 = vector.load %arg14[%c0_19, %c0_20, %c0_21] : memref<2x8x1xf32, #tpu.memory_space<vmem>>, vector<2x8x1xf32>
      %40 = arith.mulf %35, %39 : vector<2x8x1xf32>
      %cst_22 = arith.constant dense<0.000000e+00> : vector<2x8xf32>
      %41 = vector.multi_reduction <add>, %38, %cst_22 [2] : vector<2x8x128xf32> to vector<2x8xf32>
      %42 = vector.shape_cast %41 : vector<2x8xf32> to vector<2x8x1xf32>
      %43 = arith.addf %40, %42 : vector<2x8x1xf32>
      %c0_23 = arith.constant 0 : index
      %c0_24 = arith.constant 0 : index
      %c0_25 = arith.constant 0 : index
      %44 = vector.load %arg14[%c0_23, %c0_24, %c0_25] : memref<2x8x1xf32, #tpu.memory_space<vmem>>, vector<2x8x1xf32>
      tpu.vector_store %arg14[%c0_23, %c0_24, %c0_25], %43 {strides = array<i32>} : memref<2x8x1xf32, #tpu.memory_space<vmem>>, vector<2x8x1xf32>,
      %45 = arith.truncf %38 : vector<2x8x128xf32> to vector<2x8x128xbf16>
      %46 = arith.truncf %29 : vector<2x8x128xf32> to vector<2x8x128xbf16>
      %cst_26 = arith.constant dense<0.000000e+00> : vector<2x8x8xf32>
      %47 = tpu.matmul %45, %46, %cst_26 {dimension_numbers = #tpu.dot_dimension_numbers<[2], [2], [1], [1], [0, 0, 0, 1, 1, 1], [0], [0]>} : vector<2x8x128xbf16>, vector<2x8x128xbf16>, vector<2x8x8xf32> -> vector<2x8x8xf32>
      %c0_27 = arith.constant 0 : index
      %c0_28 = arith.constant 0 : index
      %c0_29 = arith.constant 0 : index
      %48 = vector.load %arg15[%c0_27, %c0_28, %c0_29] : memref<2x8x8xf32, #tpu.memory_space<vmem>>, vector<2x8x8xf32>
      %49 = vector.broadcast %35 : vector<2x8x1xf32> to vector<2x8x8xf32>
      %50 = arith.mulf %49, %48 : vector<2x8x8xf32>
      %51 = arith.addf %50, %47 : vector<2x8x8xf32>
      %c0_30 = arith.constant 0 : index
      %c0_31 = arith.constant 0 : index
      %c0_32 = arith.constant 0 : index
      %52 = vector.load %arg15[%c0_30, %c0_31, %c0_32] : memref<2x8x8xf32, #tpu.memory_space<vmem>>, vector<2x8x8xf32>
      tpu.vector_store %arg15[%c0_30, %c0_31, %c0_32], %51 {strides = array<i32>} : memref<2x8x8xf32, #tpu.memory_space<vmem>>, vector<2x8x8xf32>,
      %c0_33 = arith.constant 0 : index
      %c0_34 = arith.constant 0 : index
      %c0_35 = arith.constant 0 : index
      %53 = vector.load %arg13[%c0_33, %c0_34, %c0_35] : memref<2x8x1xf32, #tpu.memory_space<vmem>>, vector<2x8x1xf32>
      tpu.vector_store %arg13[%c0_33, %c0_34, %c0_35], %33 {strides = array<i32>} : memref<2x8x1xf32, #tpu.memory_space<vmem>>, vector<2x8x1xf32>,
    } else {
    }
    %c1_i32 = arith.constant 1 : i32
    %8 = arith.cmpi eq, %arg1, %c1_i32 : i32
    %c0_i32_4 = arith.constant 0 : i32
    %9 = arith.cmpi eq, %arg2, %c0_i32_4 : i32
    %10 = arith.andi %8, %9 : i1
    %11 = arith.extui %10 : i1 to i32
    %c0_i32_5 = arith.constant 0 : i32
    %12 = arith.cmpi ne, %11, %c0_i32_5 : i32
    scf.if %12 {
      %c0 = arith.constant 0 : index
      %c0_11 = arith.constant 0 : index
      %c0_12 = arith.constant 0 : index
      %21 = vector.load %arg14[%c0, %c0_11, %c0_12] : memref<2x8x1xf32, #tpu.memory_space<vmem>>, vector<2x8x1xf32>
      %22 = tpu.reciprocal %21 : vector<2x8x1xf32> -> vector<2x8x1xf32>
      %c0_13 = arith.constant 0 : index
      %c0_14 = arith.constant 0 : index
      %c0_15 = arith.constant 0 : index
      %23 = vector.load %arg15[%c0_13, %c0_14, %c0_15] : memref<2x8x8xf32, #tpu.memory_space<vmem>>, vector<2x8x8xf32>
      %24 = vector.broadcast %22 : vector<2x8x1xf32> to vector<2x8x8xf32>
      %25 = arith.mulf %23, %24 : vector<2x8x8xf32>
      %26 = arith.truncf %25 : vector<2x8x8xf32> to vector<2x8x8xbf16>
      %c0_16 = arith.constant 0 : index
      %c0_17 = arith.constant 0 : index
      %27 = vector.load %arg6[%c0_16, %c0_17] : memref<8x16xbf16, #tpu.memory_space<vmem>>, vector<8x8xbf16>
      %28 = vector.extract_strided_slice %26 {offsets = [0, 0, 0], sizes = [1, 8, 8], strides = [1, 1, 1]} : vector<2x8x8xbf16> to vector<1x8x8xbf16>
      %29 = vector.shape_cast %28 : vector<1x8x8xbf16> to vector<8x8xbf16>
      %cst = arith.constant dense<0.000000e+00> : vector<8x8xf32>
      %30 = tpu.matmul %27, %29, %cst {dimension_numbers = #tpu.dot_dimension_numbers<[1], [1], [0], [0], [0, 0, 1, 0], [], []>} : vector<8x8xbf16>, vector<8x8xbf16>, vector<8x8xf32> -> vector<8x8xf32>
      %c0_18 = arith.constant 0 : index
      %c8 = arith.constant 8 : index
      %31 = vector.load %arg6[%c0_18, %c8] : memref<8x16xbf16, #tpu.memory_space<vmem>>, vector<8x8xbf16>
      %32 = vector.extract_strided_slice %26 {offsets = [1, 0, 0], sizes = [1, 8, 8], strides = [1, 1, 1]} : vector<2x8x8xbf16> to vector<1x8x8xbf16>
      %33 = vector.shape_cast %32 : vector<1x8x8xbf16> to vector<8x8xbf16>
      %cst_19 = arith.constant dense<0.000000e+00> : vector<8x8xf32>
      %34 = tpu.matmul %31, %33, %cst_19 {dimension_numbers = #tpu.dot_dimension_numbers<[1], [1], [0], [0], [0, 0, 1, 0], [], []>} : vector<8x8xbf16>, vector<8x8xbf16>, vector<8x8xf32> -> vector<8x8xf32>
      %35 = tpu.concatenate %30, %34 in 1 : vector<8x8xf32>, vector<8x8xf32> -> vector<8x16xf32>
      %36 = arith.truncf %35 : vector<8x16xf32> to vector<8x16xbf16>
      %c0_20 = arith.constant 0 : index
      %c0_21 = arith.constant 0 : index
      %37 = vector.load %arg16[%c0_20, %c0_21] : memref<8x16xbf16, #tpu.memory_space<vmem>>, vector<8x16xbf16>
      tpu.vector_store %arg16[%c0_20, %c0_21], %36 {strides = array<i32>} : memref<8x16xbf16, #tpu.memory_space<vmem>>, vector<8x16xbf16>,
      %cst_22 = arith.constant 0.000000e+00 : f32
      %38 = vector.broadcast %cst_22 : f32 to vector<8x128xf32>
      %c0_23 = arith.constant 0 : index
      %c0_24 = arith.constant 0 : index
      %39 = vector.load %arg17[%c0_23, %c0_24] : memref<8x128xf32, #tpu.memory_space<vmem>>, vector<8x128xf32>
      tpu.vector_store %arg17[%c0_23, %c0_24], %38 {strides = array<i32>} : memref<8x128xf32, #tpu.memory_space<vmem>>, vector<8x128xf32>,
      %cst_25 = arith.constant 0.000000e+00 : f32
      %40 = vector.broadcast %cst_25 : f32 to vector<8x128xf32>
      %c0_26 = arith.constant 0 : index
      %c0_27 = arith.constant 0 : index
      %41 = vector.load %arg18[%c0_26, %c0_27] : memref<8x128xf32, #tpu.memory_space<vmem>>, vector<8x128xf32>
      tpu.vector_store %arg18[%c0_26, %c0_27], %40 {strides = array<i32>} : memref<8x128xf32, #tpu.memory_space<vmem>>, vector<8x128xf32>,
    } else {
    }
    %c1_i32_6 = arith.constant 1 : i32
    %13 = arith.cmpi eq, %arg1, %c1_i32_6 : i32
    %14 = arith.extui %13 : i1 to i32
    %c0_i32_7 = arith.constant 0 : i32
    %15 = arith.cmpi ne, %14, %c0_i32_7 : i32
    scf.if %15 {
      %c0 = arith.constant 0 : index
      %c0_11 = arith.constant 0 : index
      %c0_12 = arith.constant 0 : index
      %21 = vector.load %arg3[%c0, %c0_11, %c0_12] : memref<1x8x128xf32, #tpu.memory_space<vmem>>, vector<1x8x128xf32>
      %22 = vector.shape_cast %21 : vector<1x8x128xf32> to vector<8x128xf32>
      %23 = arith.truncf %22 : vector<8x128xf32> to vector<8x128xbf16>
      %c0_13 = arith.constant 0 : index
      %c0_14 = arith.constant 0 : index
      %24 = vector.load %arg4[%c0_13, %c0_14] : memref<16x8xbf16, #tpu.memory_space<vmem>>, vector<16x8xbf16>
      %cst = arith.constant dense<0.000000e+00> : vector<16x128xf32>
      %25 = tpu.matmul %24, %23, %cst {dimension_numbers = #tpu.dot_dimension_numbers<[1], [0], [0], [1], [0, 0, 1, 1], [], []>} : vector<16x8xbf16>, vector<8x128xbf16>, vector<16x128xf32> -> vector<16x128xf32>
      %26 = vector.shape_cast %25 : vector<16x128xf32> to vector<2x8x128xf32>
      %cst_15 = arith.constant dense<0xFF800000> : vector<2x128xf32>
      %27 = vector.multi_reduction <maximumf>, %26, %cst_15 [1] : vector<2x8x128xf32> to vector<2x128xf32>
      %28 = vector.shape_cast %27 : vector<2x128xf32> to vector<2x1x128xf32>
      %29 = vector.broadcast %28 : vector<2x1x128xf32> to vector<2x8x128xf32>
      %30 = arith.subf %26, %29 : vector<2x8x128xf32>
      %31 = math.exp %30 : vector<2x8x128xf32>
      %cst_16 = arith.constant dense<0.000000e+00> : vector<2x128xf32>
      %32 = vector.multi_reduction <add>, %31, %cst_16 [1] : vector<2x8x128xf32> to vector<2x128xf32>
      %33 = vector.shape_cast %32 : vector<2x128xf32> to vector<2x1x128xf32>
      %34 = tpu.reciprocal %33 {approx = true} : vector<2x1x128xf32> -> vector<2x1x128xf32>
      %cst_17 = arith.constant 0.353553385 : f32
      %35 = vector.broadcast %cst_17 : f32 to vector<2x1x128xf32>
      %36 = arith.mulf %35, %34 : vector<2x1x128xf32>
      %37 = vector.broadcast %36 : vector<2x1x128xf32> to vector<2x8x128xf32>
      %38 = arith.mulf %31, %37 : vector<2x8x128xf32>
      %39 = vector.shape_cast %38 : vector<2x8x128xf32> to vector<16x128xf32>
      %40 = arith.truncf %39 : vector<16x128xf32> to vector<16x128xbf16>
      %c0_18 = arith.constant 0 : index
      %c0_19 = arith.constant 0 : index
      %41 = vector.load %arg16[%c0_18, %c0_19] : memref<8x16xbf16, #tpu.memory_space<vmem>>, vector<8x16xbf16>
      %cst_20 = arith.constant dense<0.000000e+00> : vector<8x128xf32>
      %42 = tpu.matmul %41, %40, %cst_20 {dimension_numbers = #tpu.dot_dimension_numbers<[1], [0], [0], [1], [0, 0, 1, 1], [], []>} : vector<8x16xbf16>, vector<16x128xbf16>, vector<8x128xf32> -> vector<8x128xf32>
      %c0_21 = arith.constant 0 : index
      %c0_22 = arith.constant 0 : index
      %43 = vector.load %arg7[%c0_21, %c0_22] : memref<8x1xf32, #tpu.memory_space<vmem>>, vector<8x1xf32>
      %44 = vector.broadcast %43 : vector<8x1xf32> to vector<8x128xf32>
      %45 = arith.addf %42, %44 : vector<8x128xf32>
      %c0_23 = arith.constant 0 : index
      %c0_24 = arith.constant 0 : index
      %c0_25 = arith.constant 0 : index
      %46 = vector.load %arg10[%c0_23, %c0_24, %c0_25] : memref<1x8x128xf32, #tpu.memory_space<vmem>>, vector<1x8x128xf32>
      %47 = vector.shape_cast %46 : vector<1x8x128xf32> to vector<8x128xf32>
      %48 = vector.shape_cast %45 : vector<8x128xf32> to vector<1x8x128xf32>
      tpu.vector_store %arg10[%c0_23, %c0_24, %c0_25], %48 {strides = array<i32>} : memref<1x8x128xf32, #tpu.memory_space<vmem>>, vector<1x8x128xf32>,
      %c0_26 = arith.constant 0 : index
      %c0_27 = arith.constant 0 : index
      %49 = vector.load %arg17[%c0_26, %c0_27] : memref<8x128xf32, #tpu.memory_space<vmem>>, vector<8x128xf32>
      %50 = arith.addf %49, %45 : vector<8x128xf32>
      %c0_28 = arith.constant 0 : index
      %c0_29 = arith.constant 0 : index
      %51 = vector.load %arg17[%c0_28, %c0_29] : memref<8x128xf32, #tpu.memory_space<vmem>>, vector<8x128xf32>
      tpu.vector_store %arg17[%c0_28, %c0_29], %50 {strides = array<i32>} : memref<8x128xf32, #tpu.memory_space<vmem>>, vector<8x128xf32>,
      %c0_30 = arith.constant 0 : index
      %c0_31 = arith.constant 0 : index
      %52 = vector.load %arg18[%c0_30, %c0_31] : memref<8x128xf32, #tpu.memory_space<vmem>>, vector<8x128xf32>
      %53 = arith.mulf %45, %45 : vector<8x128xf32>
      %54 = arith.addf %52, %53 : vector<8x128xf32>
      %c0_32 = arith.constant 0 : index
      %c0_33 = arith.constant 0 : index
      %55 = vector.load %arg18[%c0_32, %c0_33] : memref<8x128xf32, #tpu.memory_space<vmem>>, vector<8x128xf32>
      tpu.vector_store %arg18[%c0_32, %c0_33], %54 {strides = array<i32>} : memref<8x128xf32, #tpu.memory_space<vmem>>, vector<8x128xf32>,
    } else {
    }
    %c1_i32_8 = arith.constant 1 : i32
    %16 = arith.cmpi eq, %arg1, %c1_i32_8 : i32
    %c1_i32_9 = arith.constant 1 : i32
    %17 = arith.cmpi eq, %arg2, %c1_i32_9 : i32
    %18 = arith.andi %16, %17 : i1
    %19 = arith.extui %18 : i1 to i32
    %c0_i32_10 = arith.constant 0 : i32
    %20 = arith.cmpi ne, %19, %c0_i32_10 : i32
    scf.if %20 {
      %c0 = arith.constant 0 : index
      %c0_11 = arith.constant 0 : index
      %21 = vector.load %arg17[%c0, %c0_11] : memref<8x128xf32, #tpu.memory_space<vmem>>, vector<8x128xf32>
      %22 = vector.shape_cast %21 : vector<8x128xf32> to vector<1x8x128xf32>
      %cst = arith.constant dense<0.000000e+00> : vector<1xf32>
      %23 = vector.multi_reduction <add>, %22, %cst [1, 2] : vector<1x8x128xf32> to vector<1xf32>
      %24 = vector.shape_cast %23 : vector<1xf32> to vector<1x1x1xf32>
      %25 = vector.extract %24[0, 0, 0] : f32 from vector<1x1x1xf32>
      %c0_12 = arith.constant 0 : index
      %c0_13 = arith.constant 0 : index
      %26 = vector.load %arg18[%c0_12, %c0_13] : memref<8x128xf32, #tpu.memory_space<vmem>>, vector<8x128xf32>
      %27 = vector.shape_cast %26 : vector<8x128xf32> to vector<1x8x128xf32>
      %cst_14 = arith.constant dense<0.000000e+00> : vector<1xf32>
      %28 = vector.multi_reduction <add>, %27, %cst_14 [1, 2] : vector<1x8x128xf32> to vector<1xf32>
      %29 = vector.shape_cast %28 : vector<1xf32> to vector<1x1x1xf32>
      %30 = vector.extract %29[0, 0, 0] : f32 from vector<1x1x1xf32>
      %cst_15 = arith.constant 4.8828125E-4 : f32
      %31 = arith.mulf %25, %cst_15 : f32
      %cst_16 = arith.constant 4.8828125E-4 : f32
      %32 = arith.mulf %30, %cst_16 : f32
      %33 = arith.mulf %31, %31 : f32
      %34 = arith.subf %32, %33 : f32
      %cst_17 = arith.constant 0.000000e+00 : f32
      %35 = arith.maximumf %34, %cst_17 : f32
      %cst_18 = arith.constant 9.99999974E-6 : f32
      %36 = arith.addf %35, %cst_18 : f32
      %37 = math.rsqrt %36 : f32
      %c0_19 = arith.constant 0 : index
      %c0_20 = arith.constant 0 : index
      %38 = vector.load %arg8[%c0_19, %c0_20] : memref<8x1xf32, #tpu.memory_space<vmem>>, vector<8x1xf32>
      %39 = vector.broadcast %37 : f32 to vector<8x1xf32>
      %40 = arith.mulf %39, %38 : vector<8x1xf32>
      %c0_21 = arith.constant 0 : index
      %c0_22 = arith.constant 0 : index
      %c0_23 = arith.constant 0 : index
      %41 = vector.load %arg11[%c0_21, %c0_22, %c0_23] : memref<1x8x1xf32, #tpu.memory_space<vmem>>, vector<1x8x1xf32>
      %42 = vector.shape_cast %41 : vector<1x8x1xf32> to vector<8x1xf32>
      %43 = vector.shape_cast %40 : vector<8x1xf32> to vector<1x8x1xf32>
      tpu.vector_store %arg11[%c0_21, %c0_22, %c0_23], %43 {strides = array<i32>} : memref<1x8x1xf32, #tpu.memory_space<vmem>>, vector<1x8x1xf32>,
      %c0_24 = arith.constant 0 : index
      %c0_25 = arith.constant 0 : index
      %44 = vector.load %arg9[%c0_24, %c0_25] : memref<8x1xf32, #tpu.memory_space<vmem>>, vector<8x1xf32>
      %45 = arith.mulf %31, %37 : f32
      %46 = vector.broadcast %45 : f32 to vector<8x1xf32>
      %47 = arith.mulf %46, %38 : vector<8x1xf32>
      %48 = arith.subf %44, %47 : vector<8x1xf32>
      %c0_26 = arith.constant 0 : index
      %c0_27 = arith.constant 0 : index
      %c0_28 = arith.constant 0 : index
      %49 = vector.load %arg12[%c0_26, %c0_27, %c0_28] : memref<1x8x1xf32, #tpu.memory_space<vmem>>, vector<1x8x1xf32>
      %50 = vector.shape_cast %49 : vector<1x8x1xf32> to vector<8x1xf32>
      %51 = vector.shape_cast %48 : vector<8x1xf32> to vector<1x8x1xf32>
      tpu.vector_store %arg12[%c0_26, %c0_27, %c0_28], %51 {strides = array<i32>} : memref<1x8x1xf32, #tpu.memory_space<vmem>>, vector<1x8x1xf32>,
    } else {
    }
    return
  }
  func.func @transform_0(%arg0: i32, %arg1: i32, %arg2: i32) -> (i32, i32, i32) {
    %c0_i32 = arith.constant 0 : i32
    %c0_i32_0 = arith.constant 0 : i32
    return %arg0, %c0_i32, %arg2 : i32, i32, i32
  }
  func.func @transform_1(%arg0: i32, %arg1: i32, %arg2: i32) -> (i32, i32) {
    %c0_i32 = arith.constant 0 : i32
    %c0_i32_0 = arith.constant 0 : i32
    %c0_i32_1 = arith.constant 0 : i32
    return %c0_i32, %c0_i32_0 : i32, i32
  }
  func.func @transform_2(%arg0: i32, %arg1: i32, %arg2: i32) -> (i32, i32) {
    %c0_i32 = arith.constant 0 : i32
    %c0_i32_0 = arith.constant 0 : i32
    %c0_i32_1 = arith.constant 0 : i32
    return %c0_i32, %c0_i32_0 : i32, i32
  }
  func.func @transform_3(%arg0: i32, %arg1: i32, %arg2: i32) -> (i32, i32) {
    %c0_i32 = arith.constant 0 : i32
    %c0_i32_0 = arith.constant 0 : i32
    %c0_i32_1 = arith.constant 0 : i32
    return %c0_i32, %c0_i32_0 : i32, i32
  }
  func.func @transform_4(%arg0: i32, %arg1: i32, %arg2: i32) -> (i32, i32) {
    %c0_i32 = arith.constant 0 : i32
    %c0_i32_0 = arith.constant 0 : i32
    %c0_i32_1 = arith.constant 0 : i32
    return %c0_i32, %c0_i32_0 : i32, i32
  }
  func.func @transform_5(%arg0: i32, %arg1: i32, %arg2: i32) -> (i32, i32) {
    %c0_i32 = arith.constant 0 : i32
    %c0_i32_0 = arith.constant 0 : i32
    %c0_i32_1 = arith.constant 0 : i32
    return %c0_i32, %c0_i32_0 : i32, i32
  }
  func.func @transform_6(%arg0: i32, %arg1: i32, %arg2: i32) -> (i32, i32) {
    %c0_i32 = arith.constant 0 : i32
    %c0_i32_0 = arith.constant 0 : i32
    %c0_i32_1 = arith.constant 0 : i32
    return %c0_i32, %c0_i32_0 : i32, i32
  }
  func.func @transform_7(%arg0: i32, %arg1: i32, %arg2: i32) -> (i32, i32, i32) {
    %0 = arith.muli %arg1, %arg2 : i32
    %c0_i32 = arith.constant 0 : i32
    %c0_i32_0 = arith.constant 0 : i32
    return %arg0, %c0_i32, %0 : i32, i32, i32
  }
  func.func @transform_8(%arg0: i32, %arg1: i32, %arg2: i32) -> (i32, i32, i32) {
    %c0_i32 = arith.constant 0 : i32
    %c0_i32_0 = arith.constant 0 : i32
    %c0_i32_1 = arith.constant 0 : i32
    return %arg0, %c0_i32, %c0_i32_0 : i32, i32, i32
  }
  func.func @transform_9(%arg0: i32, %arg1: i32, %arg2: i32) -> (i32, i32, i32) {
    %c0_i32 = arith.constant 0 : i32
    %c0_i32_0 = arith.constant 0 : i32
    %c0_i32_1 = arith.constant 0 : i32
    return %arg0, %c0_i32, %c0_i32_0 : i32, i32, i32
  }
}

</mosaic_0001>

<llo_original>
// kernel: tpu_custom_call.1
$region0: #{tpu_custom_call.1}
  #allocation0 [shape = 'u32[]', space=smem, size = 0x4, offset = 0x4, fixed_abs, tag = 'smem constant byte address 0x4 - core index']
  #allocation1 [shape = 'u32[144,128]{1,0:T(1,128)}', space=vmem, size = 0x12000, scoped, tag = 'internal scratch']
  #allocation2 [shape = 'f32[2,8,1]{2,1,0:T(8,128)}', space=vmem, size = 0x2000, scoped, tag = 'scratch operand']
  #allocation3 [shape = 'f32[2,8,1]{2,1,0:T(8,128)}', space=vmem, size = 0x2000, scoped, tag = 'scratch operand']
  #allocation4 [shape = 'f32[2,8,8]{2,1,0:T(8,128)}', space=vmem, size = 0x2000, scoped, tag = 'scratch operand']
  #allocation5 [shape = 'bf16[8,16]{1,0:T(8,128)(2,1)}', space=vmem, size = 0x800, scoped, tag = 'scratch operand']
  #allocation6 [shape = 'f32[8,128]{1,0:T(8,128)}', space=vmem, size = 0x1000, scoped, tag = 'scratch operand']
  #allocation7 [shape = 'f32[8,128]{1,0:T(8,128)}', space=vmem, size = 0x1000, scoped, tag = 'scratch operand']
  %s0 = inlined_call_operand.vmem [shape: f32[2,8,256], index: 0, kind: input, shape index: {}]
  %s1 = inlined_call_operand.vmem [shape: bf16[16,8], index: 1, kind: input, shape index: {}]
  %s2 = inlined_call_operand.vmem [shape: bf16[32,8], index: 2, kind: input, shape index: {}]
  %s3 = inlined_call_operand.vmem [shape: bf16[8,16], index: 3, kind: input, shape index: {}]
  %s4 = inlined_call_operand.vmem [shape: f32[8,1], index: 4, kind: input, shape index: {}]
  %s5 = inlined_call_operand.vmem [shape: f32[8,1], index: 5, kind: input, shape index: {}]
  %s6 = inlined_call_operand.vmem [shape: f32[8,1], index: 6, kind: input, shape index: {}]
  %s7 = inlined_call_operand.hbm [shape: f32[2,8,256], index: 7, kind: output, shape index: {0}]
  %s8 = inlined_call_operand.vmem [shape: f32[2,8,1], index: 8, kind: output, shape index: {1}]
  %s9 = inlined_call_operand.vmem [shape: f32[2,8,1], index: 9, kind: output, shape index: {2}]
  %10 = xla_tuple %s7, %s8, %s9
  %s11 = sld [smem:[#allocation0]]
  $region97: #{tpu_custom_call.1} parent=0
    _
  %s13 = ssub.s32 1, %s11
  %s14 = scalar_select 0, %s13, %s11
  $region1: #{tpu_custom_call.1} parent=0
    #allocation8 [shape = 'u8[8192]{0}', space=vmem, size = 0x2000, scoped, tag = 'output window, operand 0']
    #allocation9 [shape = 's32[2]{0}', space=sflag, size = 0x8, scoped, tag = 'scoped memory for tpu_custom_call.1']
    %15 = vsyncpa [#allocation9], 0
    %s16 = scalar_lea.sflag [#allocation9], 1
    %17 = vsyncpa %s16, 0
    loop: start=0, step=1, limit=10
    $region2: #{tpu_custom_call.1} parent=1 // loop_pre_header
      _
    $region3: #{tpu_custom_call.1} parent=1 // loop_header
      %s19 = sphi 0, %s23
      %p20 = scmp.ge.s32.totalorder %s19, 10
      %s26 = sphi 0, %s45
      %s27 = sphi 0, %s41
      %s28 = sphi 0, %s37
      %s29 = sphi 0, %s26
      %s30 = sphi 0, %s27
      %s31 = sphi 0, %s28
      %s32 = sphi 0, %s29
      %s33 = sphi 0, %s30
      %s34 = sphi 0, %s31
      %s50 = sphi 0, %s52
      %s53 = sphi 0, %s50
      %s54 = sphi 0, %s53
      %s70 = sphi 0, %s54
      %s74 = sphi 0, %s74
      %s76 = sphi 0, %s74
      %s77 = sphi 0, %s76
      %s91 = sphi 0, %s77
      %s95 = sphi 0, %s95
      %s97 = sphi 0, %s95
      %s98 = sphi 0, %s97
      %s112 = sphi 0, %s98
      %s116 = sphi 0, %s116
      %s118 = sphi 0, %s116
      %s119 = sphi 0, %s118
      %s133 = sphi 0, %s119
      %s137 = sphi 0, %s137
      %s139 = sphi 0, %s137
      %s140 = sphi 0, %s139
      %s154 = sphi 0, %s140
      %s158 = sphi 0, %s158
      %s160 = sphi 0, %s158
      %s161 = sphi 0, %s160
      %s175 = sphi 0, %s161
      %s179 = sphi 0, %s179
      %s181 = sphi 0, %s179
      %s182 = sphi 0, %s181
      %s196 = sphi 0, %s182
      %s206 = sphi 0, %s208
      %s209 = sphi 0, %s206
      %s210 = sphi 0, %s209
      %s226 = sphi 0, %s210
      %s232 = sphi 0, %s234
      %s235 = sphi 0, %s232
      %s236 = sphi 0, %s235
      %s252 = sphi 0, %s236
      %s258 = sphi 0, %s260
      %s261 = sphi 0, %s258
      %s262 = sphi 0, %s261
      %s278 = sphi 0, %s262
    $region4: #{tpu_custom_call.1} parent=1 // loop_header_branch
      %22 = sbr.rel (%p20) target = $region8
    $region5: #{tpu_custom_call.1} parent=1 // loop_body
      %s24 = ssub.s32 %s19, 1
      %s25 = ssub.s32 %s19, 2
      %s35 = sadd.s32 1, %s28
      %p36 = scmp.ge.s32.totalorder %s35, 2
      %s37 = scalar_select %p36, 0, %s35
      %s38 = sadd.s32 1, %s27
      %s39 = scalar_select %p36, %s38, %s27
      %p40 = scmp.ge.s32.totalorder %s39, 2
      %s41 = scalar_select %p40, 0, %s39
      %s42 = sadd.s32 1, %s26
      %s43 = scalar_select %p40, %s42, %s26
      %p44 = scmp.ge.s32.totalorder %s43, 2
      %s45 = scalar_select %p44, 0, %s43
      %s46 = ssub.s32 %s26, %s45
      %s47 = ssub.s32 %s28, %s37
      %s48 = sor.u32 %s46, %s47
      %p49 = scmp.eq.s32.totalorder %s48, 0
      %s51 = sadd.s32 %s50, 1
      %s52 = scalar_select %p49, %s50, %s51
      %p55 = pneg %p49
      %p56 = scmp.eq.s32.totalorder %s19, 7
      %p57 = por %p55, %p56
      %p58 = scmp.ne.s32.totalorder %s50, %s53
      %p59 = scmp.eq.s32.totalorder %s19, 0
      %p60 = por %p58, %p59
      %p61 = scmp.ne.s32.totalorder %s50, %s53
      %p62 = scmp.eq.s32.totalorder %s24, 7
      %p63 = por %p61, %p62
      %p64 = scmp.ne.s32.totalorder %s53, %s54
      %p65 = scmp.eq.s32.totalorder %s24, 0
      %p66 = por %p64, %p65
      %p67 = scmp.ne.s32.totalorder %s53, %s54
      %p68 = scmp.eq.s32.totalorder %s25, 7
      %p69 = por %p67, %p68
      %p71 = scmp.ne.s32.totalorder %s54, %s70
      %p72 = scmp.eq.s32.totalorder %s25, 0
      %p73 = por %p71, %p72
      %s75 = sadd.s32 %s74, 1
      %p78 = scmp.eq.s32.totalorder %s19, 7
      %p79 = scmp.ne.s32.totalorder %s74, %s76
      %p80 = scmp.eq.s32.totalorder %s19, 0
      %p81 = por %p79, %p80
      %p82 = scmp.ne.s32.totalorder %s74, %s76
      %p83 = scmp.eq.s32.totalorder %s24, 7
      %p84 = por %p82, %p83
      %p85 = scmp.ne.s32.totalorder %s76, %s77
      %p86 = scmp.eq.s32.totalorder %s24, 0
      %p87 = por %p85, %p86
      %p88 = scmp.ne.s32.totalorder %s76, %s77
      %p89 = scmp.eq.s32.totalorder %s25, 7
      %p90 = por %p88, %p89
      %p92 = scmp.ne.s32.totalorder %s77, %s91
      %p93 = scmp.eq.s32.totalorder %s25, 0
      %p94 = por %p92, %p93
      %s96 = sadd.s32 %s95, 1
      %p99 = scmp.eq.s32.totalorder %s19, 7
      %p100 = scmp.ne.s32.totalorder %s95, %s97
      %p101 = scmp.eq.s32.totalorder %s19, 0
      %p102 = por %p100, %p101
      %p103 = scmp.ne.s32.totalorder %s95, %s97
      %p104 = scmp.eq.s32.totalorder %s24, 7
      %p105 = por %p103, %p104
      %p106 = scmp.ne.s32.totalorder %s97, %s98
      %p107 = scmp.eq.s32.totalorder %s24, 0
      %p108 = por %p106, %p107
      %p109 = scmp.ne.s32.totalorder %s97, %s98
      %p110 = scmp.eq.s32.totalorder %s25, 7
      %p111 = por %p109, %p110
      %p113 = scmp.ne.s32.totalorder %s98, %s112
      %p114 = scmp.eq.s32.totalorder %s25, 0
      %p115 = por %p113, %p114
      %s117 = sadd.s32 %s116, 1
      %p120 = scmp.eq.s32.totalorder %s19, 7
      %p121 = scmp.ne.s32.totalorder %s116, %s118
      %p122 = scmp.eq.s32.totalorder %s19, 0
      %p123 = por %p121, %p122
      %p124 = scmp.ne.s32.totalorder %s116, %s118
      %p125 = scmp.eq.s32.totalorder %s24, 7
      %p126 = por %p124, %p125
      %p127 = scmp.ne.s32.totalorder %s118, %s119
      %p128 = scmp.eq.s32.totalorder %s24, 0
      %p129 = por %p127, %p128
      %p130 = scmp.ne.s32.totalorder %s118, %s119
      %p131 = scmp.eq.s32.totalorder %s25, 7
      %p132 = por %p130, %p131
      %p134 = scmp.ne.s32.totalorder %s119, %s133
      %p135 = scmp.eq.s32.totalorder %s25, 0
      %p136 = por %p134, %p135
      %s138 = sadd.s32 %s137, 1
      %p141 = scmp.eq.s32.totalorder %s19, 7
      %p142 = scmp.ne.s32.totalorder %s137, %s139
      %p143 = scmp.eq.s32.totalorder %s19, 0
      %p144 = por %p142, %p143
      %p145 = scmp.ne.s32.totalorder %s137, %s139
      %p146 = scmp.eq.s32.totalorder %s24, 7
      %p147 = por %p145, %p146
      %p148 = scmp.ne.s32.totalorder %s139, %s140
      %p149 = scmp.eq.s32.totalorder %s24, 0
      %p150 = por %p148, %p149
      %p151 = scmp.ne.s32.totalorder %s139, %s140
      %p152 = scmp.eq.s32.totalorder %s25, 7
      %p153 = por %p151, %p152
      %p155 = scmp.ne.s32.totalorder %s140, %s154
      %p156 = scmp.eq.s32.totalorder %s25, 0
      %p157 = por %p155, %p156
      %s159 = sadd.s32 %s158, 1
      %p162 = scmp.eq.s32.totalorder %s19, 7
      %p163 = scmp.ne.s32.totalorder %s158, %s160
      %p164 = scmp.eq.s32.totalorder %s19, 0
      %p165 = por %p163, %p164
      %p166 = scmp.ne.s32.totalorder %s158, %s160
      %p167 = scmp.eq.s32.totalorder %s24, 7
      %p168 = por %p166, %p167
      %p169 = scmp.ne.s32.totalorder %s160, %s161
      %p170 = scmp.eq.s32.totalorder %s24, 0
      %p171 = por %p169, %p170
      %p172 = scmp.ne.s32.totalorder %s160, %s161
      %p173 = scmp.eq.s32.totalorder %s25, 7
      %p174 = por %p172, %p173
      %p176 = scmp.ne.s32.totalorder %s161, %s175
      %p177 = scmp.eq.s32.totalorder %s25, 0
      %p178 = por %p176, %p177
      %s180 = sadd.s32 %s179, 1
      %p183 = scmp.eq.s32.totalorder %s19, 7
      %p184 = scmp.ne.s32.totalorder %s179, %s181
      %p185 = scmp.eq.s32.totalorder %s19, 0
      %p186 = por %p184, %p185
      %p187 = scmp.ne.s32.totalorder %s179, %s181
      %p188 = scmp.eq.s32.totalorder %s24, 7
      %p189 = por %p187, %p188
      %p190 = scmp.ne.s32.totalorder %s181, %s182
      %p191 = scmp.eq.s32.totalorder %s24, 0
      %p192 = por %p190, %p191
      %p193 = scmp.ne.s32.totalorder %s181, %s182
      %p194 = scmp.eq.s32.totalorder %s25, 7
      %p195 = por %p193, %p194
      %p197 = scmp.ne.s32.totalorder %s182, %s196
      %p198 = scmp.eq.s32.totalorder %s25, 0
      %p199 = por %p197, %p198
      %s200 = smul.u32 %s27, %s28
      %s201 = smul.u32 %s41, %s37
      %s202 = ssub.s32 %s26, %s45
      %s203 = ssub.s32 %s200, %s201
      %s204 = sor.u32 %s202, %s203
      %p205 = scmp.eq.s32.totalorder %s204, 0
      %s207 = sadd.s32 %s206, 1
      %s208 = scalar_select %p205, %s206, %s207
      %p211 = pneg %p205
      %p212 = scmp.eq.s32.totalorder %s19, 7
      %p213 = por %p211, %p212
      %p214 = scmp.ne.s32.totalorder %s206, %s209
      %p215 = scmp.eq.s32.totalorder %s19, 0
      %p216 = por %p214, %p215
      %p217 = scmp.ne.s32.totalorder %s206, %s209
      %p218 = scmp.eq.s32.totalorder %s24, 7
      %p219 = por %p217, %p218
      %p220 = scmp.ne.s32.totalorder %s209, %s210
      %p221 = scmp.eq.s32.totalorder %s24, 0
      %p222 = por %p220, %p221
      %p223 = scmp.ne.s32.totalorder %s209, %s210
      %p224 = scmp.eq.s32.totalorder %s25, 7
      %p225 = por %p223, %p224
      %p227 = scmp.ne.s32.totalorder %s210, %s226
      %p228 = scmp.eq.s32.totalorder %s25, 0
      %p229 = por %p227, %p228
      %s230 = ssub.s32 %s26, %s45
      %p231 = scmp.eq.s32.totalorder %s230, 0
      %s233 = sadd.s32 %s232, 1
      %s234 = scalar_select %p231, %s232, %s233
      %p237 = pneg %p231
      %p238 = scmp.eq.s32.totalorder %s19, 7
      %p239 = por %p237, %p238
      %p240 = scmp.ne.s32.totalorder %s232, %s235
      %p241 = scmp.eq.s32.totalorder %s19, 0
      %p242 = por %p240, %p241
      %p243 = scmp.ne.s32.totalorder %s232, %s235
      %p244 = scmp.eq.s32.totalorder %s24, 7
      %p245 = por %p243, %p244
      %p246 = scmp.ne.s32.totalorder %s235, %s236
      %p247 = scmp.eq.s32.totalorder %s24, 0
      %p248 = por %p246, %p247
      %p249 = scmp.ne.s32.totalorder %s235, %s236
      %p250 = scmp.eq.s32.totalorder %s25, 7
      %p251 = por %p249, %p250
      %p253 = scmp.ne.s32.totalorder %s236, %s252
      %p254 = scmp.eq.s32.totalorder %s25, 0
      %p255 = por %p253, %p254
      %s256 = ssub.s32 %s26, %s45
      %p257 = scmp.eq.s32.totalorder %s256, 0
      %s259 = sadd.s32 %s258, 1
      %s260 = scalar_select %p257, %s258, %s259
      %p263 = pneg %p257
      %p264 = scmp.eq.s32.totalorder %s19, 7
      %p265 = por %p263, %p264
      %p266 = scmp.ne.s32.totalorder %s258, %s261
      %p267 = scmp.eq.s32.totalorder %s19, 0
      %p268 = por %p266, %p267
      %p269 = scmp.ne.s32.totalorder %s258, %s261
      %p270 = scmp.eq.s32.totalorder %s24, 7
      %p271 = por %p269, %p270
      %p272 = scmp.ne.s32.totalorder %s261, %s262
      %p273 = scmp.eq.s32.totalorder %s24, 0
      %p274 = por %p272, %p273
      %p275 = scmp.ne.s32.totalorder %s261, %s262
      %p276 = scmp.eq.s32.totalorder %s25, 7
      %p277 = por %p275, %p276
      %p279 = scmp.ne.s32.totalorder %s262, %s278
      %p280 = scmp.eq.s32.totalorder %s25, 0
      %p281 = por %p279, %p280
      %p282 = scmp.le.s32.totalorder 1, %s19
      %p283 = scmp.lt.s32.totalorder %s19, 9
      %p284 = pnand %p282, %p283
      %p285 = pneg %p284
      // Predicated region
      $region9: #{tpu_custom_call.1} parent=5 // pred_check
        _
      $region10: #{tpu_custom_call.1} parent=5 // pred_check_branch
        %287 = sbr.rel (%p284) target = $region12
      $region11: #{tpu_custom_call.1} parent=5 // pred_region
        %s288 = ssub.s32 %s19, 1
        // Predicated region
        $region13: #{tpu_custom_call.1} parent=11 // pred_check
          %p289 = pneg %p87
        $region14: #{tpu_custom_call.1} parent=11 // pred_check_branch
          %291 = sbr.rel (%p289) target = $region16
        $region15: #{tpu_custom_call.1} parent=11 // pred_region
          _
        $region16: #{tpu_custom_call.1} parent=11 // pred_fallthru
          _
        // Predicated region
        $region17: #{tpu_custom_call.1} parent=11 // pred_check
          %p292 = pneg %p108
        $region18: #{tpu_custom_call.1} parent=11 // pred_check_branch
          %294 = sbr.rel (%p292) target = $region20
        $region19: #{tpu_custom_call.1} parent=11 // pred_region
          _
        $region20: #{tpu_custom_call.1} parent=11 // pred_fallthru
          _
        // Predicated region
        $region21: #{tpu_custom_call.1} parent=11 // pred_check
          %p295 = pneg %p129
        $region22: #{tpu_custom_call.1} parent=11 // pred_check_branch
          %297 = sbr.rel (%p295) target = $region24
        $region23: #{tpu_custom_call.1} parent=11 // pred_region
          _
        $region24: #{tpu_custom_call.1} parent=11 // pred_fallthru
          _
        // Predicated region
        $region25: #{tpu_custom_call.1} parent=11 // pred_check
          %p298 = pneg %p150
        $region26: #{tpu_custom_call.1} parent=11 // pred_check_branch
          %300 = sbr.rel (%p298) target = $region28
        $region27: #{tpu_custom_call.1} parent=11 // pred_region
          _
        $region28: #{tpu_custom_call.1} parent=11 // pred_fallthru
          _
        // Predicated region
        $region29: #{tpu_custom_call.1} parent=11 // pred_check
          %p301 = pneg %p171
        $region30: #{tpu_custom_call.1} parent=11 // pred_check_branch
          %303 = sbr.rel (%p301) target = $region32
        $region31: #{tpu_custom_call.1} parent=11 // pred_region
          _
        $region32: #{tpu_custom_call.1} parent=11 // pred_fallthru
          _
        // Predicated region
        $region33: #{tpu_custom_call.1} parent=11 // pred_check
          %p304 = pneg %p192
        $region34: #{tpu_custom_call.1} parent=11 // pred_check_branch
          %306 = sbr.rel (%p304) target = $region36
        $region35: #{tpu_custom_call.1} parent=11 // pred_region
          _
        $region36: #{tpu_custom_call.1} parent=11 // pred_fallthru
          _
      $region12: #{tpu_custom_call.1} parent=5 // pred_fallthru
        _
      %p307 = scmp.lt.s32.totalorder %s19, 8
      // Predicated region
      $region37: #{tpu_custom_call.1} parent=5 // pred_check
        %p308 = pneg %p307
      $region38: #{tpu_custom_call.1} parent=5 // pred_check_branch
        %310 = sbr.rel (%p308) target = $region40
      $region39: #{tpu_custom_call.1} parent=5 // pred_region
        // Predicated region
        $region41: #{tpu_custom_call.1} parent=39 // pred_check
          %p311 = pneg %p60
        $region42: #{tpu_custom_call.1} parent=39 // pred_check_branch
          %313 = sbr.rel (%p311) target = $region44
        $region43: #{tpu_custom_call.1} parent=39 // pred_region
          %p314 = scmp.lt.s32.totalorder %s26, 1
          %s315 = scalar_select %p314, %s26, 1
          %p316 = scmp.lt.s32.totalorder %s28, 1
          %s317 = scalar_select %p316, %s28, 1
          %s318 = smul.addr %s315, 2
          %s319 = sadd.s32 %s317, %s318
          %s320 = smul.addr %s319, 8
          %s321 = scalar_lea.vmem %s0, %s320
        $region44: #{tpu_custom_call.1} parent=39 // pred_fallthru
          _
      $region40: #{tpu_custom_call.1} parent=5 // pred_fallthru
        _
      %p322 = scmp.le.s32.totalorder 1, %s19
      %p323 = scmp.lt.s32.totalorder %s19, 9
      %p324 = pnand %p322, %p323
      %p325 = pneg %p324
      // Predicated region
      $region45: #{tpu_custom_call.1} parent=5 // pred_check
        _
      $region46: #{tpu_custom_call.1} parent=5 // pred_check_branch
        %327 = sbr.rel (%p324) target = $region48
      $region47: #{tpu_custom_call.1} parent=5 // pred_region
        %s328 = ssub.s32 %s19, 1
        %p329 = scmp.lt.s32.totalorder %s29, 1
        %s330 = scalar_select %p329, %s29, 1
        %p331 = scmp.lt.s32.totalorder %s31, 1
        %s332 = scalar_select %p331, %s31, 1
        %s333 = smul.addr %s330, 2
        %s334 = sadd.s32 %s332, %s333
        %s335 = smul.addr %s334, 8
        %s336 = scalar_lea.vmem %s0, %s335
        %p337 = pneg %p66
        %p338 = pneg %p63
        %p339 = pneg %p87
        %p340 = pneg %p84
        %p341 = pneg %p108
        %p342 = pneg %p105
        %p343 = pneg %p129
        %p344 = pneg %p126
        %p345 = pneg %p150
        %p346 = pneg %p147
        %p347 = pneg %p171
        %p348 = pneg %p168
        %p349 = pneg %p192
        %p350 = pneg %p189
        %p351 = pneg %p222
        %p352 = pneg %p219
        %s353 = sand.u32 %s209, 1
        %s354 = scalar_lea.sflag [#allocation9], %s353
        %s355 = sand.u32 %s209, 1
        %s356 = smul.addr %s355, 8
        %s357 = scalar_lea.vmem [#allocation8], %s356
        %p358 = pneg %p248
        %p359 = pneg %p245
        %p360 = scmp.lt.s32.totalorder %s29, 1
        %s361 = scalar_select %p360, %s29, 1
        %s362 = smul.addr %s361, 8
        %s363 = scalar_lea.vmem %s8, %s362
        %p364 = pneg %p274
        %p365 = pneg %p271
        %p366 = scmp.lt.s32.totalorder %s29, 1
        %s367 = scalar_select %p366, %s29, 1
        %s368 = smul.addr %s367, 8
        %s369 = scalar_lea.vmem %s9, %s368
        %p370 = scmp.lt.s32.totalorder %s29, 1
        %s371 = scalar_select %p370, %s29, 1
        %p372 = scmp.lt.s32.totalorder %s31, 1
        %s373 = scalar_select %p372, %s31, 1
        %s374 = smul.addr %s371, 2
        %s375 = sadd.s32 %s373, %s374
        %s376 = smul.addr %s375, 8
        %s377 = scalar_lea.vmem %s0, %s376
        %s378 = smul.u32 %s30, %s31
        %p379 = scmp.lt.s32.totalorder %s29, 1
        %s380 = scalar_select %p379, %s29, 1
        %s381 = smul.addr %s380, 8
        %s382 = scalar_lea.vmem %s8, %s381
        %p383 = scmp.lt.s32.totalorder %s29, 1
        %s384 = scalar_select %p383, %s29, 1
        %s385 = smul.addr %s384, 8
        %s386 = scalar_lea.vmem %s9, %s385
        %p388 = scmp.eq.s32.totalorder %s30, 0
        %p389 = scmp.eq.s32.totalorder %s31, 0
        %p390 = pnand %p388, %p389
        %p391 = pneg %p390
        // Predicated region
        $region49: #{tpu_custom_call.1} parent=47 // pred_check
          _
        $region50: #{tpu_custom_call.1} parent=47 // pred_check_branch
          %393 = sbr.rel (%p390) target = $region52
        $region51: #{tpu_custom_call.1} parent=47 // pred_region
          %vm394 = vcmask 7168
          %395 = vst.msk [vmem:[#allocation2] sm:$0xff] %vm394, -inf
          %396 = vst.msk [vmem:[#allocation2 + $0x8] sm:$0xff] %vm394, -inf
          %397 = vst.msk [vmem:[#allocation3] sm:$0xff] %vm394, 0.0
          %398 = vst.msk [vmem:[#allocation3 + $0x8] sm:$0xff] %vm394, 0.0
          %vm399 = vcmask 64512
          %400 = vst.msk [vmem:[#allocation4] sm:$0xff] %vm399, 0.0
          %401 = vst.msk [vmem:[#allocation4 + $0x8] sm:$0xff] %vm399, 0.0
        $region52: #{tpu_custom_call.1} parent=47 // pred_fallthru
          _
        // Predicated region
        $region53: #{tpu_custom_call.1} parent=47 // pred_check
          %p402 = pneg %p388
        $region54: #{tpu_custom_call.1} parent=47 // pred_check_branch
          %404 = sbr.rel (%p402) target = $region56
        $region55: #{tpu_custom_call.1} parent=47 // pred_region
          %v405 = vld [vmem:[%s377] sm:$0xff]
          %v406 = vpack.c.bf16 %v405, %v405
          %v407 = vld [vmem:[%s2] sm:$0xf]
          %v408 = vld [vmem:[%s2 + $0x4] sm:$0xf]
          %v409 = vld [vmem:[%s2 + $0x8] sm:$0xf]
          %v410 = vld [vmem:[%s2 + $0xc] sm:$0xf]
          %v415 = vunpack.c.l.b16 %v407
          %v416 = vunpack.c.l.b16 %v408
          %v417 = vunpack.c.l.b16 %v409
          %v418 = vunpack.c.l.b16 %v410
          %v419 = vpack.c.b16 %v416, %v415
          %v420 = vpack.c.b16 %v418, %v417
          %vm421 = vcmask 64512
          %v423 = vsel %vm421, %v419, 0
          %v426 = vsel %vm421, %v420, 0
          %vm428 = vcmask 1043456
          %v430 = vsel %vm428, %v406, 0
          %432 = vmatprep.subr.bf16.mxu0 0
          %433 = vmatpush1.bf16.msra.mxu0 %v430
          %434 = vmatprep.subr.bf16.mxu0 0
          %435 = vmatpush1.bf16.msra.mxu0 0
          %436 = vmatprep.subr.bf16.mxu0 0
          %437 = vmatpush1.bf16.msra.mxu0 0
          %438 = vmatprep.subr.bf16.mxu0 0
          %439 = vmatpush1.bf16.msra.mxu0 0
          %440 = vmatprep.subr.bf16.mxu0 0
          %441 = vmatpush1.bf16.msra.mxu0 0
          %442 = vmatprep.subr.bf16.mxu0 0
          %443 = vmatpush1.bf16.msra.mxu0 0
          %444 = vmatprep.subr.bf16.mxu0 0
          %445 = vmatpush1.bf16.msra.mxu0 0
          %446 = vmatprep.subr.bf16.mxu0 0
          %447 = vmatpush1.bf16.msra.mxu0 0
          %448 = vmatprep.subr.bf16.mxu0 0
          %449 = vmatpush1.bf16.msra.mxu0 0
          %450 = vmatprep.subr.bf16.mxu0 0
          %451 = vmatpush1.bf16.msra.mxu0 0
          %452 = vmatprep.subr.bf16.mxu0 0
          %453 = vmatpush1.bf16.msra.mxu0 0
          %454 = vmatprep.subr.bf16.mxu0 0
          %455 = vmatpush1.bf16.msra.mxu0 0
          %456 = vmatprep.subr.bf16.mxu0 0
          %457 = vmatpush1.bf16.msra.mxu0 0
          %458 = vmatprep.subr.bf16.mxu0 0
          %459 = vmatpush1.bf16.msra.mxu0 0
          %460 = vmatprep.subr.bf16.mxu0 0
          %461 = vmatpush1.bf16.msra.mxu0 0
          %462 = vmatprep.subr.bf16.mxu0 0
          %463 = vmatpush1.bf16.msra.mxu0 0
          %464 = vmatprep.mubr.bf16.mxu0 0
          %465 = vmatmul.mubr.bf16.gmra.mrb[0].mxu0 %v423
          %v466 = vpop.f32.mrb[0].mxu0
          %v467 = vadd.f32 0.0, %v466
          %v468 = vpop.f32.mrb[0].mxu0
          %v469 = vpop.f32.mrb[0].mxu0
          %v470 = vadd.f32 0.0, %v469
          %v471 = vpop.f32.mrb[0].mxu0
          %472 = vmatprep.mubr.bf16.mxu0 0
          %473 = vmatmul.mubr.bf16.gmra.mrb[0].mxu0 %v426
          %v474 = vpop.f32.mrb[0].mxu0
          %v475 = vadd.f32 0.0, %v474
          %v476 = vpop.f32.mrb[0].mxu0
          %v477 = vpop.f32.mrb[0].mxu0
          %v478 = vadd.f32 0.0, %v477
          %v479 = vpop.f32.mrb[0].mxu0
          %480 = vdwg.mxu0
          %v481 = vld [vmem:[#allocation2] sm:$0xff]
          %v482 = vld [vmem:[#allocation2 + $0x8] sm:$0xff]
          %483 = vmax.xlane.f32.xlu0 %v467
          %v484 = vpop.xlane.xlu0 %483
          %485 = vmax.xlane.f32.xlu0 %v470
          %v486 = vpop.xlane.xlu0 %485
          %v487 = vmax.f32 %v481, %v484
          %v488 = vmax.f32 %v482, %v486
          %v489 = vsub.f32 %v481, %v487
          %v490 = vsub.f32 %v482, %v488
          %v491 = vmul.f32 %v489, 1.442695
          %v492 = vpow.pop %v491
          %v493 = vmul.f32 %v490, 1.442695
          %v494 = vpow.pop %v493
          %496 = vset.pattern.permute.xlu0 0
          %497 = vperm.xlu0 %496, %v487
          %v498 = vpop.permute.xlu0 %497
          %501 = vset.pattern.permute.xlu0 0
          %502 = vperm.xlu0 %501, %v488
          %v503 = vpop.permute.xlu0 %502
          %v505 = vsub.f32 %v467, %v498
          %v506 = vsub.f32 %v470, %v503
          %v507 = vmul.f32 %v505, 1.442695
          %v508 = vpow.pop %v507
          %v509 = vmul.f32 %v506, 1.442695
          %v510 = vpow.pop %v509
          %v511 = vld [vmem:[#allocation3] sm:$0xff]
          %v512 = vld [vmem:[#allocation3 + $0x8] sm:$0xff]
          %v513 = vmul.f32 %v492, %v511
          %v514 = vmul.f32 %v494, %v512
          %515 = vadd.xlane.f32.xlu0 %v508
          %v516 = vpop.xlane.xlu0 %515
          %517 = vadd.xlane.f32.xlu0 %v510
          %v518 = vpop.xlane.xlu0 %517
          %v519 = vadd.f32 %v513, %v516
          %v520 = vadd.f32 %v514, %v518
          %vm521 = vcmask 7168
          %522 = vst.msk [vmem:[#allocation3] sm:$0xff] %vm521, %v519
          %523 = vst.msk [vmem:[#allocation3 + $0x8] sm:$0xff] %vm521, %v520
          %v524 = vpack.c.bf16 %v508, %v508
          %v525 = vpack.c.bf16 %v510, %v510
          %v526 = vpack.c.bf16 %v475, %v475
          %v527 = vpack.c.bf16 %v478, %v478
          %528 = vmatprep.subr.bf16.mxu0 0
          %529 = vmatpush1.bf16.xpose.msra.mxu0 %v526
          %530 = vmatprep.subr.bf16.mxu0 0
          %531 = vmatpush1.bf16.xpose.msra.mxu0 0
          %532 = vmatprep.subr.bf16.mxu0 0
          %533 = vmatpush1.bf16.xpose.msra.mxu0 0
          %534 = vmatprep.subr.bf16.mxu0 0
          %535 = vmatpush1.bf16.xpose.msra.mxu0 0
          %536 = vmatprep.subr.bf16.mxu0 0
          %537 = vmatpush1.bf16.xpose.msra.mxu0 0
          %538 = vmatprep.subr.bf16.mxu0 0
          %539 = vmatpush1.bf16.xpose.msra.mxu0 0
          %540 = vmatprep.subr.bf16.mxu0 0
          %541 = vmatpush1.bf16.xpose.msra.mxu0 0
          %542 = vmatprep.subr.bf16.mxu0 0
          %543 = vmatpush1.bf16.xpose.msra.mxu0 0
          %544 = vmatprep.subr.bf16.mxu0 0
          %545 = vmatpush1.bf16.xpose.msra.mxu0 0
          %546 = vmatprep.subr.bf16.mxu0 0
          %547 = vmatpush1.bf16.xpose.msra.mxu0 0
          %548 = vmatprep.subr.bf16.mxu0 0
          %549 = vmatpush1.bf16.xpose.msra.mxu0 0
          %550 = vmatprep.subr.bf16.mxu0 0
          %551 = vmatpush1.bf16.xpose.msra.mxu0 0
          %552 = vmatprep.subr.bf16.mxu0 0
          %553 = vmatpush1.bf16.xpose.msra.mxu0 0
          %554 = vmatprep.subr.bf16.mxu0 0
          %555 = vmatpush1.bf16.xpose.msra.mxu0 0
          %556 = vmatprep.subr.bf16.mxu0 0
          %557 = vmatpush1.bf16.xpose.msra.mxu0 0
          %558 = vmatprep.subr.bf16.mxu0 0
          %559 = vmatpush1.bf16.xpose.msra.mxu0 0
          %560 = vmatprep.mubr.bf16.mxu0 0
          %561 = vmatmul.mubr.bf16.gmra.mrb[0].mxu0 %v524
          %v562 = vpop.f32.mrb[0].mxu0
          %v563 = vadd.f32 0.0, %v562
          %v564 = vpop.f32.mrb[0].mxu0
          %v565 = vpop.f32.mrb[0].mxu0
          %v566 = vpop.f32.mrb[0].mxu0
          %567 = vdwg.mxu0
          %568 = vmatprep.subr.bf16.mxu0 0
          %569 = vmatpush1.bf16.xpose.msra.mxu0 %v527
          %570 = vmatprep.subr.bf16.mxu0 0
          %571 = vmatpush1.bf16.xpose.msra.mxu0 0
          %572 = vmatprep.subr.bf16.mxu0 0
          %573 = vmatpush1.bf16.xpose.msra.mxu0 0
          %574 = vmatprep.subr.bf16.mxu0 0
          %575 = vmatpush1.bf16.xpose.msra.mxu0 0
          %576 = vmatprep.subr.bf16.mxu0 0
          %577 = vmatpush1.bf16.xpose.msra.mxu0 0
          %578 = vmatprep.subr.bf16.mxu0 0
          %579 = vmatpush1.bf16.xpose.msra.mxu0 0
          %580 = vmatprep.subr.bf16.mxu0 0
          %581 = vmatpush1.bf16.xpose.msra.mxu0 0
          %582 = vmatprep.subr.bf16.mxu0 0
          %583 = vmatpush1.bf16.xpose.msra.mxu0 0
          %584 = vmatprep.subr.bf16.mxu0 0
          %585 = vmatpush1.bf16.xpose.msra.mxu0 0
          %586 = vmatprep.subr.bf16.mxu0 0
          %587 = vmatpush1.bf16.xpose.msra.mxu0 0
          %588 = vmatprep.subr.bf16.mxu0 0
          %589 = vmatpush1.bf16.xpose.msra.mxu0 0
          %590 = vmatprep.subr.bf16.mxu0 0
          %591 = vmatpush1.bf16.xpose.msra.mxu0 0
          %592 = vmatprep.subr.bf16.mxu0 0
          %593 = vmatpush1.bf16.xpose.msra.mxu0 0
          %594 = vmatprep.subr.bf16.mxu0 0
          %595 = vmatpush1.bf16.xpose.msra.mxu0 0
          %596 = vmatprep.subr.bf16.mxu0 0
          %597 = vmatpush1.bf16.xpose.msra.mxu0 0
          %598 = vmatprep.subr.bf16.mxu0 0
          %599 = vmatpush1.bf16.xpose.msra.mxu0 0
          %600 = vmatprep.mubr.bf16.mxu0 0
          %601 = vmatmul.mubr.bf16.gmra.mrb[0].mxu0 %v525
          %v602 = vpop.f32.mrb[0].mxu0
          %v603 = vadd.f32 0.0, %v602
          %v604 = vpop.f32.mrb[0].mxu0
          %v605 = vpop.f32.mrb[0].mxu0
          %v606 = vpop.f32.mrb[0].mxu0
          %607 = vdwg.mxu0
          %v608 = vld [vmem:[#allocation4] sm:$0xff]
          %v609 = vld [vmem:[#allocation4 + $0x8] sm:$0xff]
          %611 = vset.pattern.permute.xlu0 0
          %612 = vperm.xlu0 %611, %v492
          %v613 = vpop.permute.xlu0 %612
          %616 = vset.pattern.permute.xlu0 0
          %617 = vperm.xlu0 %616, %v494
          %v618 = vpop.permute.xlu0 %617
          %v620 = vmul.f32 %v613, %v608
          %v621 = vmul.f32 %v618, %v609
          %v622 = vadd.f32 %v620, %v563
          %v623 = vadd.f32 %v621, %v603
          %624 = vst.msk [vmem:[#allocation4] sm:$0xff] %vm421, %v622
          %625 = vst.msk [vmem:[#allocation4 + $0x8] sm:$0xff] %vm421, %v623
          %626 = vst.msk [vmem:[#allocation2] sm:$0xff] %vm521, %v487
          %627 = vst.msk [vmem:[#allocation2 + $0x8] sm:$0xff] %vm521, %v488
        $region56: #{tpu_custom_call.1} parent=47 // pred_fallthru
          _
        %p628 = scmp.eq.s32.totalorder %s30, 1
        %p629 = pnand %p628, %p389
        %p630 = pneg %p629
        // Predicated region
        $region57: #{tpu_custom_call.1} parent=47 // pred_check
          _
        $region58: #{tpu_custom_call.1} parent=47 // pred_check_branch
          %632 = sbr.rel (%p629) target = $region60
        $region59: #{tpu_custom_call.1} parent=47 // pred_region
          %v633 = vld [vmem:[#allocation3] sm:$0xff]
          %v634 = vld [vmem:[#allocation3 + $0x8] sm:$0xff]
          %v635 = vrcp.pop %v633
          %v636 = vrcp.pop %v634
          %v637 = vld [vmem:[#allocation4] sm:$0xff]
          %v638 = vld [vmem:[#allocation4 + $0x8] sm:$0xff]
          %640 = vset.pattern.permute.xlu0 0
          %641 = vperm.xlu0 %640, %v635
          %v642 = vpop.permute.xlu0 %641
          %645 = vset.pattern.permute.xlu0 0
          %646 = vperm.xlu0 %645, %v636
          %v647 = vpop.permute.xlu0 %646
          %v649 = vmul.f32 %v637, %v642
          %v650 = vmul.f32 %v638, %v647
          %v651 = vpack.c.bf16 %v649, %v649
          %v652 = vpack.c.bf16 %v650, %v650
          %v653 = vld [vmem:[%s3] sm:$0xf]
          %vm654 = vcmask 64512
          %v656 = vsel %vm654, %v653, 0
          %v659 = vsel %vm654, %v651, 0
          %661 = vmatprep.subr.bf16.mxu0 0
          %662 = vmatpush1.bf16.xpose.msra.mxu0 %v659
          %663 = vmatprep.subr.bf16.mxu0 0
          %664 = vmatpush1.bf16.xpose.msra.mxu0 0
          %665 = vmatprep.subr.bf16.mxu0 0
          %666 = vmatpush1.bf16.xpose.msra.mxu0 0
          %667 = vmatprep.subr.bf16.mxu0 0
          %668 = vmatpush1.bf16.xpose.msra.mxu0 0
          %669 = vmatprep.subr.bf16.mxu0 0
          %670 = vmatpush1.bf16.xpose.msra.mxu0 0
          %671 = vmatprep.subr.bf16.mxu0 0
          %672 = vmatpush1.bf16.xpose.msra.mxu0 0
          %673 = vmatprep.subr.bf16.mxu0 0
          %674 = vmatpush1.bf16.xpose.msra.mxu0 0
          %675 = vmatprep.subr.bf16.mxu0 0
          %676 = vmatpush1.bf16.xpose.msra.mxu0 0
          %677 = vmatprep.subr.bf16.mxu0 0
          %678 = vmatpush1.bf16.xpose.msra.mxu0 0
          %679 = vmatprep.subr.bf16.mxu0 0
          %680 = vmatpush1.bf16.xpose.msra.mxu0 0
          %681 = vmatprep.subr.bf16.mxu0 0
          %682 = vmatpush1.bf16.xpose.msra.mxu0 0
          %683 = vmatprep.subr.bf16.mxu0 0
          %684 = vmatpush1.bf16.xpose.msra.mxu0 0
          %685 = vmatprep.subr.bf16.mxu0 0
          %686 = vmatpush1.bf16.xpose.msra.mxu0 0
          %687 = vmatprep.subr.bf16.mxu0 0
          %688 = vmatpush1.bf16.xpose.msra.mxu0 0
          %689 = vmatprep.subr.bf16.mxu0 0
          %690 = vmatpush1.bf16.xpose.msra.mxu0 0
          %691 = vmatprep.subr.bf16.mxu0 0
          %692 = vmatpush1.bf16.xpose.msra.mxu0 0
          %693 = vmatprep.mubr.bf16.mxu0 0
          %694 = vmatmul.mubr.bf16.gmra.mrb[0].mxu0 %v656
          %v695 = vpop.f32.mrb[0].mxu0
          %v696 = vadd.f32 0.0, %v695
          %v697 = vpop.f32.mrb[0].mxu0
          %v698 = vpop.f32.mrb[0].mxu0
          %v699 = vpop.f32.mrb[0].mxu0
          %700 = vdwg.mxu0
          %v702 = vunpack.c.l.b16 %v653
          %v703 = vpack.c.b16 %v702, %v702
          %704 = vrot.lane.b32.xlu0 %v703, 120
          %v705 = vpop.permute.xlu0 %704
          %v707 = vsel %vm654, %v705, 0
          %v710 = vsel %vm654, %v652, 0
          %712 = vmatprep.subr.bf16.mxu0 0
          %713 = vmatpush1.bf16.xpose.msra.mxu0 %v710
          %714 = vmatprep.subr.bf16.mxu0 0
          %715 = vmatpush1.bf16.xpose.msra.mxu0 0
          %716 = vmatprep.subr.bf16.mxu0 0
          %717 = vmatpush1.bf16.xpose.msra.mxu0 0
          %718 = vmatprep.subr.bf16.mxu0 0
          %719 = vmatpush1.bf16.xpose.msra.mxu0 0
          %720 = vmatprep.subr.bf16.mxu0 0
          %721 = vmatpush1.bf16.xpose.msra.mxu0 0
          %722 = vmatprep.subr.bf16.mxu0 0
          %723 = vmatpush1.bf16.xpose.msra.mxu0 0
          %724 = vmatprep.subr.bf16.mxu0 0
          %725 = vmatpush1.bf16.xpose.msra.mxu0 0
          %726 = vmatprep.subr.bf16.mxu0 0
          %727 = vmatpush1.bf16.xpose.msra.mxu0 0
          %728 = vmatprep.subr.bf16.mxu0 0
          %729 = vmatpush1.bf16.xpose.msra.mxu0 0
          %730 = vmatprep.subr.bf16.mxu0 0
          %731 = vmatpush1.bf16.xpose.msra.mxu0 0
          %732 = vmatprep.subr.bf16.mxu0 0
          %733 = vmatpush1.bf16.xpose.msra.mxu0 0
          %734 = vmatprep.subr.bf16.mxu0 0
          %735 = vmatpush1.bf16.xpose.msra.mxu0 0
          %736 = vmatprep.subr.bf16.mxu0 0
          %737 = vmatpush1.bf16.xpose.msra.mxu0 0
          %738 = vmatprep.subr.bf16.mxu0 0
          %739 = vmatpush1.bf16.xpose.msra.mxu0 0
          %740 = vmatprep.subr.bf16.mxu0 0
          %741 = vmatpush1.bf16.xpose.msra.mxu0 0
          %742 = vmatprep.subr.bf16.mxu0 0
          %743 = vmatpush1.bf16.xpose.msra.mxu0 0
          %744 = vmatprep.mubr.bf16.mxu0 0
          %745 = vmatmul.mubr.bf16.gmra.mrb[0].mxu0 %v707
          %v746 = vpop.f32.mrb[0].mxu0
          %v747 = vadd.f32 0.0, %v746
          %v748 = vpop.f32.mrb[0].mxu0
          %v749 = vpop.f32.mrb[0].mxu0
          %v750 = vpop.f32.mrb[0].mxu0
          %751 = vdwg.mxu0
          %753 = vrot.lane.b32.xlu0 %v747, 8
          %v754 = vpop.permute.xlu0 %753
          %v756 = vsel %vm654, %v696, %v754
          %v757 = vpack.c.bf16 %v756, %v756
          %vm758 = vcmask 125952
          %759 = vst.msk [vmem:[#allocation5] sm:$0xf] %vm758, %v757
          %760 = vst [vmem:[#allocation6] sm:$0xff] 0.0
          %761 = vst [vmem:[#allocation7] sm:$0xff] 0.0
        $region60: #{tpu_custom_call.1} parent=47 // pred_fallthru
          _
        // Predicated region
        $region61: #{tpu_custom_call.1} parent=47 // pred_check
          %p762 = pneg %p628
        $region62: #{tpu_custom_call.1} parent=47 // pred_check_branch
          %764 = sbr.rel (%p762) target = $region64
        $region63: #{tpu_custom_call.1} parent=47 // pred_region
          %v765 = vld [vmem:[%s377] sm:$0xff]
          %v766 = vpack.c.bf16 %v765, %v765
          %v767 = vld [vmem:[%s1] sm:$0xf]
          %v768 = vld [vmem:[%s1 + $0x4] sm:$0xf]
          %v771 = vunpack.c.l.b16 %v767
          %v772 = vunpack.c.l.b16 %v768
          %v773 = vpack.c.b16 %v772, %v771
          %vm774 = vcmask 64512
          %v776 = vsel %vm774, %v773, 0
          %vm778 = vcmask 1043456
          %v780 = vsel %vm778, %v766, 0
          %782 = vmatprep.subr.bf16.mxu0 0
          %783 = vmatpush1.bf16.msra.mxu0 %v780
          %784 = vmatprep.subr.bf16.mxu0 0
          %785 = vmatpush1.bf16.msra.mxu0 0
          %786 = vmatprep.subr.bf16.mxu0 0
          %787 = vmatpush1.bf16.msra.mxu0 0
          %788 = vmatprep.subr.bf16.mxu0 0
          %789 = vmatpush1.bf16.msra.mxu0 0
          %790 = vmatprep.subr.bf16.mxu0 0
          %791 = vmatpush1.bf16.msra.mxu0 0
          %792 = vmatprep.subr.bf16.mxu0 0
          %793 = vmatpush1.bf16.msra.mxu0 0
          %794 = vmatprep.subr.bf16.mxu0 0
          %795 = vmatpush1.bf16.msra.mxu0 0
          %796 = vmatprep.subr.bf16.mxu0 0
          %797 = vmatpush1.bf16.msra.mxu0 0
          %798 = vmatprep.subr.bf16.mxu0 0
          %799 = vmatpush1.bf16.msra.mxu0 0
          %800 = vmatprep.subr.bf16.mxu0 0
          %801 = vmatpush1.bf16.msra.mxu0 0
          %802 = vmatprep.subr.bf16.mxu0 0
          %803 = vmatpush1.bf16.msra.mxu0 0
          %804 = vmatprep.subr.bf16.mxu0 0
          %805 = vmatpush1.bf16.msra.mxu0 0
          %806 = vmatprep.subr.bf16.mxu0 0
          %807 = vmatpush1.bf16.msra.mxu0 0
          %808 = vmatprep.subr.bf16.mxu0 0
          %809 = vmatpush1.bf16.msra.mxu0 0
          %810 = vmatprep.subr.bf16.mxu0 0
          %811 = vmatpush1.bf16.msra.mxu0 0
          %812 = vmatprep.subr.bf16.mxu0 0
          %813 = vmatpush1.bf16.msra.mxu0 0
          %814 = vmatprep.mubr.bf16.mxu0 0
          %815 = vmatmul.mubr.bf16.gmra.mrb[0].mxu0 %v776
          %v816 = vpop.f32.mrb[0].mxu0
          %v817 = vadd.f32 0.0, %v816
          %v818 = vpop.f32.mrb[0].mxu0
          %v819 = vpop.f32.mrb[0].mxu0
          %v820 = vadd.f32 0.0, %v819
          %v821 = vpop.f32.mrb[0].mxu0
          %822 = vdwg.mxu0
          %v823 = vrot.slane %v817, 4
          %v824 = vmax.f32 %v817, %v823
          %v825 = vrot.slane %v824, 2
          %v826 = vmax.f32 %v824, %v825
          %v827 = vrot.slane %v826, 1
          %v828 = vmax.f32 %v826, %v827
          %v829 = vrot.slane %v820, 4
          %v830 = vmax.f32 %v820, %v829
          %v831 = vrot.slane %v830, 2
          %v832 = vmax.f32 %v830, %v831
          %v833 = vrot.slane %v832, 1
          %v834 = vmax.f32 %v832, %v833
          %v835 = vsub.f32 %v817, %v828
          %v836 = vsub.f32 %v820, %v834
          %v837 = vmul.f32 %v835, 1.442695
          %v838 = vpow.pop %v837
          %v839 = vmul.f32 %v836, 1.442695
          %v840 = vpow.pop %v839
          %v841 = vrot.slane %v838, 4
          %v842 = vadd.f32 %v838, %v841
          %v843 = vrot.slane %v842, 2
          %v844 = vadd.f32 %v842, %v843
          %v845 = vrot.slane %v844, 1
          %v846 = vadd.f32 %v844, %v845
          %v847 = vrot.slane %v840, 4
          %v848 = vadd.f32 %v840, %v847
          %v849 = vrot.slane %v848, 2
          %v850 = vadd.f32 %v848, %v849
          %v851 = vrot.slane %v850, 1
          %v852 = vadd.f32 %v850, %v851
          %v853 = vrcp.pop %v846
          %v854 = vrcp.pop %v852
          %v855 = vmul.f32 %v853, 0.35355338
          %v856 = vmul.f32 %v854, 0.35355338
          %v857 = vmul.f32 %v838, %v855
          %v858 = vmul.f32 %v840, %v856
          %v859 = vpack.c.bf16 %v858, %v857
          %v860 = vld [vmem:[#allocation5] sm:$0xf]
          %v861 = vld [vmem:[%s4] sm:$0xff]
          %863 = vset.pattern.permute.xlu0 0
          %864 = vperm.xlu0 %863, %v861
          %v865 = vpop.permute.xlu0 %864
          %vm867 = vcmask 130048
          %v869 = vsel %vm867, %v860, 0
          %871 = vmatprep.subr.bf16.mxu0 0
          %872 = vmatpush1.bf16.msra.mxu0 %v859
          %873 = vmatprep.subr.bf16.mxu0 0
          %874 = vmatpush1.bf16.msra.mxu0 0
          %875 = vmatprep.subr.bf16.mxu0 0
          %876 = vmatpush1.bf16.msra.mxu0 0
          %877 = vmatprep.subr.bf16.mxu0 0
          %878 = vmatpush1.bf16.msra.mxu0 0
          %879 = vmatprep.subr.bf16.mxu0 0
          %880 = vmatpush1.bf16.msra.mxu0 0
          %881 = vmatprep.subr.bf16.mxu0 0
          %882 = vmatpush1.bf16.msra.mxu0 0
          %883 = vmatprep.subr.bf16.mxu0 0
          %884 = vmatpush1.bf16.msra.mxu0 0
          %885 = vmatprep.subr.bf16.mxu0 0
          %886 = vmatpush1.bf16.msra.mxu0 0
          %887 = vmatprep.subr.bf16.mxu0 0
          %888 = vmatpush1.bf16.msra.mxu0 0
          %889 = vmatprep.subr.bf16.mxu0 0
          %890 = vmatpush1.bf16.msra.mxu0 0
          %891 = vmatprep.subr.bf16.mxu0 0
          %892 = vmatpush1.bf16.msra.mxu0 0
          %893 = vmatprep.subr.bf16.mxu0 0
          %894 = vmatpush1.bf16.msra.mxu0 0
          %895 = vmatprep.subr.bf16.mxu0 0
          %896 = vmatpush1.bf16.msra.mxu0 0
          %897 = vmatprep.subr.bf16.mxu0 0
          %898 = vmatpush1.bf16.msra.mxu0 0
          %899 = vmatprep.subr.bf16.mxu0 0
          %900 = vmatpush1.bf16.msra.mxu0 0
          %901 = vmatprep.subr.bf16.mxu0 0
          %902 = vmatpush1.bf16.msra.mxu0 0
          %903 = vmatprep.mubr.bf16.mxu0 0
          %904 = vmatmul.mubr.bf16.gmra.mrb[0].mxu0 %v869
          %v905 = vpop.f32.mrb[0].mxu0
          %v906 = vadd.f32 %v865, %v905
          %v907 = vpop.f32.mrb[0].mxu0
          %v908 = vpop.f32.mrb[0].mxu0
          %v909 = vpop.f32.mrb[0].mxu0
          %910 = vdwg.mxu0
          %911 = vst [vmem:[%s357] sm:$0xff] %v906
          %v912 = vld [vmem:[#allocation6] sm:$0xff]
          %v913 = vadd.f32 %v912, %v906
          %914 = vst [vmem:[#allocation6] sm:$0xff] %v913
          %v915 = vld [vmem:[#allocation7] sm:$0xff]
          %v916 = vmul.f32 %v906, %v906
          %v917 = vadd.f32 %v915, %v916
          %918 = vst [vmem:[#allocation7] sm:$0xff] %v917
        $region64: #{tpu_custom_call.1} parent=47 // pred_fallthru
          _
        %p919 = scmp.eq.s32.totalorder %s31, 1
        %p920 = pnand %p628, %p919
        %p921 = pneg %p920
        // Predicated region
        $region65: #{tpu_custom_call.1} parent=47 // pred_check
          _
        $region66: #{tpu_custom_call.1} parent=47 // pred_check_branch
          %923 = sbr.rel (%p920) target = $region68
        $region67: #{tpu_custom_call.1} parent=47 // pred_region
          %v924 = vld [vmem:[#allocation6] sm:$0xff]
          %925 = vadd.xlane.f32.xlu0 %v924
          %v926 = vpop.xlane.xlu0 %925
          %v927 = vrot.slane %v926, 4
          %v928 = vadd.f32 %v926, %v927
          %v929 = vrot.slane %v928, 2
          %v930 = vadd.f32 %v928, %v929
          %v931 = vrot.slane %v930, 1
          %v932 = vadd.f32 %v930, %v931
          %s933 = vtos %v932
          %v934 = vld [vmem:[#allocation7] sm:$0xff]
          %935 = vadd.xlane.f32.xlu0 %v934
          %v936 = vpop.xlane.xlu0 %935
          %v937 = vrot.slane %v936, 4
          %v938 = vadd.f32 %v936, %v937
          %v939 = vrot.slane %v938, 2
          %v940 = vadd.f32 %v938, %v939
          %v941 = vrot.slane %v940, 1
          %v942 = vadd.f32 %v940, %v941
          %s943 = vtos %v942
          %s944 = smul.f32 %s933, 0.00048828125
          %s945 = smul.f32 %s943, 0.00048828125
          %s946 = smul.f32 %s944, %s944
          %s947 = ssub.f32 %s945, %s946
          %s948 = smax.f32 %s947, 0.0
          %s949 = sadd.f32 %s948, 1e-05
          %v950 = vstv %s949
          %v951 = vrsqrt.pop %v950
          %s952 = vtos %v951
          %v953 = vld [vmem:[%s5] sm:$0xff]
          %v954 = vstv %s952
          %v955 = vmul.f32 %v954, %v953
          %vm956 = vcmask 7168
          %957 = vst.msk [vmem:[%s382] sm:$0xff] %vm956, %v955
          %v958 = vld [vmem:[%s6] sm:$0xff]
          %s959 = smul.f32 %s944, %s952
          %v960 = vstv %s959
          %v961 = vmul.f32 %v960, %v953
          %v962 = vsub.f32 %v958, %v961
          %963 = vst.msk [vmem:[%s386] sm:$0xff] %vm956, %v962
        $region68: #{tpu_custom_call.1} parent=47 // pred_fallthru
          _
        %s964 = sand.u32 %s209, 1
        %s965 = scalar_lea.sflag [#allocation9], %s964
        %s966 = sand.u32 %s209, 1
        %s967 = smul.addr %s966, 8
        %s968 = scalar_lea.vmem [#allocation8], %s967
        %p969 = scmp.lt.s32.totalorder %s29, 1
        %s970 = scalar_select %p969, %s29, 1
        %s971 = smul.addr %s970, 8
        %s972 = scalar_lea.vmem %s8, %s971
        %p973 = scmp.lt.s32.totalorder %s29, 1
        %s974 = scalar_select %p973, %s29, 1
        %s975 = smul.addr %s974, 8
        %s976 = scalar_lea.vmem %s9, %s975
        // Predicated region
        $region69: #{tpu_custom_call.1} parent=47 // pred_check
          %p977 = pneg %p219
        $region70: #{tpu_custom_call.1} parent=47 // pred_check_branch
          %979 = sbr.rel (%p977) target = $region72
        $region71: #{tpu_custom_call.1} parent=47 // pred_region
          %s980 = smul.u32 %s30, %s31
          %s982 = ssub.s32 128, 128
          %983 = vsyncadd %s965, %s982
          %s984 = smul.addr %s29, 2
          %s985 = sadd.s32 %s980, %s984
          %s986 = smul.addr %s985, 128
          %s987 = scalar_lea.hbm %s7, %s986
          %s989 = sshll.u32 %s968, 4
          %s990 = int_to_ptr.vmem [resolvable:$true] %s989
          %992 = dma.vmem_to_hbm [thread:$0]  %s990, 128, %s987, %s965
        $region72: #{tpu_custom_call.1} parent=47 // pred_fallthru
          _
        // Predicated region
        $region73: #{tpu_custom_call.1} parent=47 // pred_check
          %p993 = pneg %p245
        $region74: #{tpu_custom_call.1} parent=47 // pred_check_branch
          %995 = sbr.rel (%p993) target = $region76
        $region75: #{tpu_custom_call.1} parent=47 // pred_region
          _
        $region76: #{tpu_custom_call.1} parent=47 // pred_fallthru
          _
        // Predicated region
        $region77: #{tpu_custom_call.1} parent=47 // pred_check
          %p996 = pneg %p271
        $region78: #{tpu_custom_call.1} parent=47 // pred_check_branch
          %998 = sbr.rel (%p996) target = $region80
        $region79: #{tpu_custom_call.1} parent=47 // pred_region
          _
        $region80: #{tpu_custom_call.1} parent=47 // pred_fallthru
          _
      $region48: #{tpu_custom_call.1} parent=5 // pred_fallthru
        _
      %p999 = scmp.le.s32.totalorder 2, %s19
      // Predicated region
      $region81: #{tpu_custom_call.1} parent=5 // pred_check
        %p1000 = pneg %p999
      $region82: #{tpu_custom_call.1} parent=5 // pred_check_branch
        %1002 = sbr.rel (%p1000) target = $region84
      $region83: #{tpu_custom_call.1} parent=5 // pred_region
        %s1003 = ssub.s32 %s19, 2
        // Predicated region
        $region85: #{tpu_custom_call.1} parent=83 // pred_check
          %p1004 = pneg %p225
        $region86: #{tpu_custom_call.1} parent=83 // pred_check_branch
          %1006 = sbr.rel (%p1004) target = $region88
        $region87: #{tpu_custom_call.1} parent=83 // pred_region
          %s1007 = sand.u32 %s210, 1
          %s1008 = scalar_lea.sflag [#allocation9], %s1007
          %s1009 = sand.u32 %s210, 1
          %s1010 = smul.addr %s1009, 8
          %s1011 = scalar_lea.vmem [#allocation8], %s1010
          %1012 = dma.done %s1008, 128
        $region88: #{tpu_custom_call.1} parent=83 // pred_fallthru
          _
        // Predicated region
        $region89: #{tpu_custom_call.1} parent=83 // pred_check
          %p1013 = pneg %p251
        $region90: #{tpu_custom_call.1} parent=83 // pred_check_branch
          %1015 = sbr.rel (%p1013) target = $region92
        $region91: #{tpu_custom_call.1} parent=83 // pred_region
          %p1016 = scmp.lt.s32.totalorder %s32, 1
          %s1017 = scalar_select %p1016, %s32, 1
          %s1018 = smul.addr %s1017, 8
          %s1019 = scalar_lea.vmem %s8, %s1018
        $region92: #{tpu_custom_call.1} parent=83 // pred_fallthru
          _
        // Predicated region
        $region93: #{tpu_custom_call.1} parent=83 // pred_check
          %p1020 = pneg %p277
        $region94: #{tpu_custom_call.1} parent=83 // pred_check_branch
          %1022 = sbr.rel (%p1020) target = $region96
        $region95: #{tpu_custom_call.1} parent=83 // pred_region
          %p1023 = scmp.lt.s32.totalorder %s32, 1
          %s1024 = scalar_select %p1023, %s32, 1
          %s1025 = smul.addr %s1024, 8
          %s1026 = scalar_lea.vmem %s9, %s1025
        $region96: #{tpu_custom_call.1} parent=83 // pred_fallthru
          _
      $region84: #{tpu_custom_call.1} parent=5 // pred_fallthru
        _
    $region6: #{tpu_custom_call.1} parent=1 // loop_footer
      %s23 = sadd.s32 1, %s19
    $region7: #{tpu_custom_call.1} parent=1 // loop_footer_branch
      %18 = sbr.rel target = $region3
    $region8: #{tpu_custom_call.1} parent=1 // loop_exit
      _
    %1027 = vsyncpa [#allocation9], 1
    %s1028 = scalar_lea.sflag [#allocation9], 1
    %1029 = vsyncpa %s1028, 1

</llo_original>
